<compile_context>
chip_gen: v5e
topology: v5e:2x2
jax: 0.10.0
libtpu: 0.0.40
codegen_flags: <defaults>
</compile_context>

<pallas_src>
import functools
import math

import jax
import jax.numpy as jnp
import numpy as np
from jax.experimental import pallas as pl
from jax.experimental.pallas import tpu as pltpu


def rgcn_kernel(adj_ref, relmsg_ref, h_ref, prevh_ref,
                wn_ref, wloop_ref, ws_ref, bs_ref, out_ref, *, deg_col):
    tile_n, d_pad = out_ref.shape
    i = pl.program_id(0)

    # Neighbor aggregation: (A @ h + relmsg) @ W, with relmsg precomputed in
    # the wrapper.  Single big MXU matmul over the full node-column dim.
    gathered = jnp.dot(adj_ref[...], h_ref[...],
                       preferred_element_type=jnp.float32)      # (tile_n, d_pad)

    # In-degree rides along for free: h carries a column of ones at `deg_col`
    # inside its zero padding, so gathered[:, deg_col] == row-sum of adj.
    deg = gathered[:, deg_col:deg_col + 1]                       # (tile_n, 1)
    has_in = deg > 0.0
    norm = jnp.where(has_in,
                     pl.reciprocal(jnp.maximum(deg, 1.0), approx=True),
                     1.0)

    gathered = gathered + relmsg_ref[...].astype(jnp.float32)
    # w_neighbor's padded rows (incl. row deg_col) are zero, so the degree
    # column contributes nothing here.
    h_agg = jnp.dot(gathered.astype(wn_ref.dtype), wn_ref[...],
                    preferred_element_type=jnp.float32) * norm   # apply_func

    # Self-loop: one fused (tile_n, D) x (D, 2D) matmul, then pick
    # loop_weight (in_degree > 0) vs evolve_loop_weight per row.
    row0 = pl.multiple_of(i * tile_n, tile_n)
    h_tile = h_ref[pl.ds(row0, tile_n), :]
    loop_both = jnp.dot(h_tile, wloop_ref[...],
                        preferred_element_type=jnp.float32)      # (tile_n, 2D)
    loop_msg = jnp.where(has_in, loop_both[:, :d_pad], loop_both[:, d_pad:])

    # Skip-connection gate: sigmoid via the tanh form -> single EUP push.
    gate_lin = jnp.dot(prevh_ref[...], ws_ref[...],
                       preferred_element_type=jnp.float32) + bs_ref[...]
    gate = 0.5 * (1.0 + jnp.tanh(0.5 * gate_lin))

    prev_h = prevh_ref[...].astype(jnp.float32)
    node_repr = gate * (h_agg + loop_msg) + (1.0 - gate) * prev_h
    out_ref[...] = jnp.maximum(node_repr, 0.0).astype(out_ref.dtype)   # ReLU


def _round_up(x, m):
    return ((x + m - 1) // m) * m


def _choose_tile_n(n_pad):
    # >=2 grid steps so ("parallel",) can shard rows across v7x's two
    # TensorCores; cap the tile for VMEM; tile must divide n_pad (mult of 8).
    if n_pad <= 128:
        return n_pad
    half = n_pad // 2                      # n_pad is a multiple of 128
    if half <= 512:
        return half
    for t in (512, 384, 256, 128):
        if n_pad % t == 0:
            return t
    return 128


def build_dense_inputs(h, prev_h, emb_rel, src, dst, etype, params, *,
                       n_pad, d_pad, deg_col, matmul_dtype):
    """Graph/param-dependent preprocessing (plain XLA).

    For a static graph, jit and cache this result across layers / timesteps:
    at small N these dense scatters + pads dominate end-to-end wall clock."""
    N, D = h.shape
    R = emb_rel.shape[0]
    f32 = jnp.float32

    # Dense scatter operands replacing per-edge gathers (built exactly in f32):
    #   A[n, m]   = #edges m -> n
    #   relmsg[n] = sum_{e: dst(e)=n} emb_rel[type(e)]   (hoisted out of kernel)
    adj = jnp.zeros((n_pad, n_pad), f32).at[dst, src].add(1.0)
    relcnt = jnp.zeros((n_pad, R), f32).at[dst, etype].add(1.0)
    relmsg = relcnt @ emb_rel                                    # (n_pad, D)

    def pad2(x, rows, cols):
        return jnp.pad(x, ((0, rows - x.shape[0]), (0, cols - x.shape[1])))

    # Plant a column of ones at `deg_col` inside h's zero padding; adj @ h then
    # produces the in-degree for free in that lane.
    h_p = pad2(h, n_pad, d_pad).at[:, deg_col].set(1.0)
    prevh_p = pad2(prev_h, n_pad, d_pad)
    relmsg_p = pad2(relmsg, n_pad, d_pad)
    wn_p = pad2(params["w_neighbor"], d_pad, d_pad)
    wloop_p = jnp.concatenate(
        [pad2(params["loop_w"], d_pad, d_pad),
         pad2(params["evolve_loop_w"], d_pad, d_pad)], axis=1)   # (D, 2D) fused
    ws_p = pad2(params["skip_w"], d_pad, d_pad)
    bs_p = jnp.pad(params["skip_b"], (0, d_pad - D)).reshape(1, d_pad)

    # NOTE: bf16 holds integer edge counts exactly only up to 256; use the
    # f32 path for graphs with >256 parallel edges between any node pair.
    md = matmul_dtype
    return (adj.astype(md), relmsg_p.astype(md), h_p.astype(md),
            prevh_p.astype(md), wn_p.astype(md), wloop_p.astype(md),
            ws_p.astype(md), bs_p.astype(f32))


def new_rgcn_layer(h, prev_h, emb_rel, src, dst, etype, params, *,
                   tile_n=None, matmul_dtype=jnp.bfloat16,
                   out_dtype=jnp.float32):
    N, D = h.shape

    d_pad = _round_up(D, 128)          # lane-dense feature dim
    deg_col = D                        # spare padding lane for the degree trick
    if deg_col >= d_pad:               # D itself a multiple of 128
        d_pad += 128
    n_pad = _round_up(N, 128)          # lane-dense adj columns / MXU K dim

    if tile_n is None:
        tile_n = _choose_tile_n(n_pad)
    assert tile_n % 8 == 0 and n_pad % tile_n == 0, (tile_n, n_pad)

    (adj, relmsg_p, h_p, prevh_p, wn_p, wloop_p, ws_p, bs_p) = \
        build_dense_inputs(h, prev_h, emb_rel, src, dst, etype, params,
                           n_pad=n_pad, d_pad=d_pad, deg_col=deg_col,
                           matmul_dtype=matmul_dtype)

    esize = jnp.dtype(matmul_dtype).itemsize
    osize = jnp.dtype(out_dtype).itemsize
    flops = 2 * n_pad * d_pad * (n_pad + 4 * d_pad)
    bytes_accessed = ((n_pad * n_pad + 3 * n_pad * d_pad + 4 * d_pad * d_pad
                       ) * esize + d_pad * 4 + n_pad * d_pad * osize)
    cost = pl.CostEstimate(flops=flops,
                           transcendentals=n_pad * (d_pad + 1),
                           bytes_accessed=bytes_accessed)

    # Resident (grid-invariant) + double-buffered per-tile VMEM footprint;
    # clamp the requested limit to v7x's 64 MiB physical ceiling.
    resident = (n_pad * d_pad + 4 * d_pad * d_pad + d_pad * 4) * esize
    per_tile = (tile_n * n_pad + 2 * tile_n * d_pad) * esize + tile_n * d_pad * osize
    vmem_limit = int(min(64 << 20, max(32 << 20, 2 * (resident + 2 * per_tile))))

    out = pl.pallas_call(
        functools.partial(rgcn_kernel, deg_col=deg_col),
        out_shape=jax.ShapeDtypeStruct((n_pad, d_pad), out_dtype),
        grid=(n_pad // tile_n,),
        in_specs=[
            pl.BlockSpec((tile_n, n_pad), lambda i: (i, 0)),      # adj row tile
            pl.BlockSpec((tile_n, d_pad), lambda i: (i, 0)),      # relmsg tile
            pl.BlockSpec((n_pad, d_pad), lambda i: (0, 0)),       # h (resident)
            pl.BlockSpec((tile_n, d_pad), lambda i: (i, 0)),      # prev_h tile
            pl.BlockSpec((d_pad, d_pad), lambda i: (0, 0)),       # w_neighbor
            pl.BlockSpec((d_pad, 2 * d_pad), lambda i: (0, 0)),   # [loop|evolve]
            pl.BlockSpec((d_pad, d_pad), lambda i: (0, 0)),       # skip_w
            pl.BlockSpec((1, d_pad), lambda i: (0, 0)),           # skip_b
        ],
        out_specs=pl.BlockSpec((tile_n, d_pad), lambda i: (i, 0)),
        compiler_params=pltpu.CompilerParams(
            dimension_semantics=("parallel",),
            vmem_limit_bytes=vmem_limit),
        cost_estimate=cost,
    )(adj, relmsg_p, h_p, prevh_p, wn_p, wloop_p, ws_p, bs_p)

    return out[:N, :D]


def xavier_uniform(key, shape, gain):
    fan_in, fan_out = shape
    a = gain * math.sqrt(6.0 / (fan_in + fan_out))
    return jax.random.uniform(key, shape, jnp.float32, minval=-a, maxval=a)


if __name__ == "__main__":
    key = jax.random.PRNGKey(0)
    N, D, E, num_rels = 256, 32, 1024, 5     # nodes, in=out feat, edges, rels
    gain = math.sqrt(2.0)                     # nn.init.calculate_gain('relu')

    keys = jax.random.split(key, 10)
    params = {
        "w_neighbor":    xavier_uniform(keys[0], (D, D), gain),
        "loop_w":        xavier_uniform(keys[1], (D, D), gain),
        "evolve_loop_w": xavier_uniform(keys[2], (D, D), gain),
        "skip_w":        xavier_uniform(keys[3], (D, D), gain),
        "skip_b":        jnp.zeros((D,), jnp.float32),
    }

    h = jax.random.normal(keys[4], (N, D), jnp.float32)       # g.ndata['h']
    prev_h = jax.random.normal(keys[5], (N, D), jnp.float32)
    emb_rel = jax.random.normal(keys[6], (num_rels, D), jnp.float32)
    src = jax.random.randint(keys[7], (E,), 0, N)
    dst = jax.random.randint(keys[8], (E,), 0, N)
    etype = jax.random.randint(keys[9], (E,), 0, num_rels)

    # pure-JAX f32 reference (mirrors the PyTorch forward)
    msg = (h[src] + emb_rel[etype]) @ params["w_neighbor"]
    agg = jnp.zeros((N, D), jnp.float32).at[dst].add(msg)
    deg = jnp.zeros((N,), jnp.float32).at[dst].add(1.0)
    norm = jnp.where(deg > 0, 1.0 / jnp.maximum(deg, 1.0), 1.0)[:, None]
    h_agg = agg * norm
    loop = jnp.where((deg > 0)[:, None],
                     h @ params["loop_w"], h @ params["evolve_loop_w"])
    gate = jax.nn.sigmoid(prev_h @ params["skip_w"] + params["skip_b"])
    ref = np.asarray(jnp.maximum(gate * (h_agg + loop) + (1.0 - gate) * prev_h,
                                 0.0))

    # f32 matmul path: near-exact (only approx-reciprocal norm differs)
    out_f32 = jax.block_until_ready(
        new_rgcn_layer(h, prev_h, emb_rel, src, dst, etype, params,
                       matmul_dtype=jnp.float32))
    np.testing.assert_allclose(np.asarray(out_f32), ref, rtol=1e-2, atol=1e-2)

    # bf16 matmul path (default — what v5e/v6e/v7x should run): loose check
    out_bf16 = jax.block_until_ready(
        new_rgcn_layer(h, prev_h, emb_rel, src, dst, etype, params))
    np.testing.assert_allclose(np.asarray(out_bf16), ref, rtol=1e-1, atol=1e-1)

    print("KERNEL_OK")
</pallas_src>

<mosaic_0001>
module attributes {stable_mosaic.version = 11 : i64} {
  func.func @rgcn_kernel(%arg0: i32, %arg1: memref<128x256xf32, #tpu.memory_space<vmem>>, %arg2: memref<128x128xf32, #tpu.memory_space<vmem>>, %arg3: memref<256x128xf32, #tpu.memory_space<vmem>>, %arg4: memref<128x128xf32, #tpu.memory_space<vmem>>, %arg5: memref<128x128xf32, #tpu.memory_space<vmem>>, %arg6: memref<128x256xf32, #tpu.memory_space<vmem>>, %arg7: memref<128x128xf32, #tpu.memory_space<vmem>>, %arg8: memref<1x128xf32, #tpu.memory_space<vmem>>, %arg9: memref<128x128xf32, #tpu.memory_space<vmem>>) attributes {dimension_semantics = [#tpu.dimension_semantics<parallel>], iteration_bounds = array<i64: 2>, scalar_prefetch = 0 : i64, scratch_operands = 0 : i64, tpu.core_type = #tpu.core_type<tc>, window_params = [{transform_indices = @transform_0, window_bounds = array<i64: 128, 256>}, {transform_indices = @transform_1, window_bounds = array<i64: 128, 128>}, {pipeline_mode = #tpu.pipeline_mode<synchronous>, transform_indices = @transform_2, window_bounds = array<i64: 256, 128>}, {transform_indices = @transform_3, window_bounds = array<i64: 128, 128>}, {pipeline_mode = #tpu.pipeline_mode<synchronous>, transform_indices = @transform_4, window_bounds = array<i64: 128, 128>}, {pipeline_mode = #tpu.pipeline_mode<synchronous>, transform_indices = @transform_5, window_bounds = array<i64: 128, 256>}, {pipeline_mode = #tpu.pipeline_mode<synchronous>, transform_indices = @transform_6, window_bounds = array<i64: 128, 128>}, {pipeline_mode = #tpu.pipeline_mode<synchronous>, transform_indices = @transform_7, window_bounds = array<i64: 1, 128>}, {transform_indices = @transform_8, window_bounds = array<i64: 128, 128>}]} {
    %c0 = arith.constant 0 : index
    %c0_0 = arith.constant 0 : index
    %0 = vector.load %arg1[%c0, %c0_0] : memref<128x256xf32, #tpu.memory_space<vmem>>, vector<128x256xf32>
    %c0_1 = arith.constant 0 : index
    %c0_2 = arith.constant 0 : index
    %1 = vector.load %arg3[%c0_1, %c0_2] : memref<256x128xf32, #tpu.memory_space<vmem>>, vector<256x128xf32>
    %cst = arith.constant dense<0.000000e+00> : vector<128x128xf32>
    %2 = tpu.matmul %0, %1, %cst {dimension_numbers = #tpu.dot_dimension_numbers<[1], [0], [0], [1], [0, 0, 1, 1], [], []>} : vector<128x256xf32>, vector<256x128xf32>, vector<128x128xf32> -> vector<128x128xf32>
    %3 = vector.extract_strided_slice %2 {offsets = [0, 32], sizes = [128, 1], strides = [1, 1]} : vector<128x128xf32> to vector<128x1xf32>
    %cst_3 = arith.constant 0.000000e+00 : f32
    %4 = vector.broadcast %cst_3 : f32 to vector<128x1xf32>
    %5 = arith.cmpf ogt, %3, %4 : vector<128x1xf32>
    %cst_4 = arith.constant 1.000000e+00 : f32
    %6 = vector.broadcast %cst_4 : f32 to vector<128x1xf32>
    %7 = arith.maximumf %3, %6 : vector<128x1xf32>
    %8 = tpu.reciprocal %7 {approx = true} : vector<128x1xf32> -> vector<128x1xf32>
    %cst_5 = arith.constant 1.000000e+00 : f32
    %9 = vector.broadcast %cst_5 : f32 to vector<128x1xf32>
    %10 = arith.select %5, %8, %9 : vector<128x1xi1>, vector<128x1xf32>
    %c0_6 = arith.constant 0 : index
    %c0_7 = arith.constant 0 : index
    %11 = vector.load %arg2[%c0_6, %c0_7] : memref<128x128xf32, #tpu.memory_space<vmem>>, vector<128x128xf32>
    %12 = arith.addf %2, %11 : vector<128x128xf32>
    %c0_8 = arith.constant 0 : index
    %c0_9 = arith.constant 0 : index
    %13 = vector.load %arg5[%c0_8, %c0_9] : memref<128x128xf32, #tpu.memory_space<vmem>>, vector<128x128xf32>
    %cst_10 = arith.constant dense<0.000000e+00> : vector<128x128xf32>
    %14 = tpu.matmul %12, %13, %cst_10 {dimension_numbers = #tpu.dot_dimension_numbers<[1], [0], [0], [1], [0, 0, 1, 1], [], []>} : vector<128x128xf32>, vector<128x128xf32>, vector<128x128xf32> -> vector<128x128xf32>
    %15 = vector.broadcast %10 : vector<128x1xf32> to vector<128x128xf32>
    %16 = arith.mulf %14, %15 : vector<128x128xf32>
    %c128_i32 = arith.constant 128 : i32
    %17 = arith.muli %arg0, %c128_i32 : i32
    %18 = tpu.assume_multiple %17, 128 : i32
    %19 = arith.index_cast %18 : i32 to index
    %c0_11 = arith.constant 0 : index
    %20 = vector.load %arg3[%19, %c0_11] : memref<256x128xf32, #tpu.memory_space<vmem>>, vector<128x128xf32>
    %c0_12 = arith.constant 0 : index
    %c0_13 = arith.constant 0 : index
    %21 = vector.load %arg6[%c0_12, %c0_13] : memref<128x256xf32, #tpu.memory_space<vmem>>, vector<128x256xf32>
    %cst_14 = arith.constant dense<0.000000e+00> : vector<128x256xf32>
    %22 = tpu.matmul %20, %21, %cst_14 {dimension_numbers = #tpu.dot_dimension_numbers<[1], [0], [0], [1], [0, 0, 1, 1], [], []>} : vector<128x128xf32>, vector<128x256xf32>, vector<128x256xf32> -> vector<128x256xf32>
    %23 = vector.extract_strided_slice %22 {offsets = [0, 0], sizes = [128, 128], strides = [1, 1]} : vector<128x256xf32> to vector<128x128xf32>
    %24 = vector.extract_strided_slice %22 {offsets = [0, 128], sizes = [128, 128], strides = [1, 1]} : vector<128x256xf32> to vector<128x128xf32>
    %25 = vector.shape_cast %5 : vector<128x1xi1> to vector<128x1xi1>
    %26 = vector.broadcast %25 : vector<128x1xi1> to vector<128x128xi1>
    %27 = arith.select %26, %23, %24 : vector<128x128xi1>, vector<128x128xf32>
    %c0_15 = arith.constant 0 : index
    %c0_16 = arith.constant 0 : index
    %28 = vector.load %arg4[%c0_15, %c0_16] : memref<128x128xf32, #tpu.memory_space<vmem>>, vector<128x128xf32>
    %c0_17 = arith.constant 0 : index
    %c0_18 = arith.constant 0 : index
    %29 = vector.load %arg7[%c0_17, %c0_18] : memref<128x128xf32, #tpu.memory_space<vmem>>, vector<128x128xf32>
    %cst_19 = arith.constant dense<0.000000e+00> : vector<128x128xf32>
    %30 = tpu.matmul %28, %29, %cst_19 {dimension_numbers = #tpu.dot_dimension_numbers<[1], [0], [0], [1], [0, 0, 1, 1], [], []>} : vector<128x128xf32>, vector<128x128xf32>, vector<128x128xf32> -> vector<128x128xf32>
    %c0_20 = arith.constant 0 : index
    %c0_21 = arith.constant 0 : index
    %31 = vector.load %arg8[%c0_20, %c0_21] : memref<1x128xf32, #tpu.memory_space<vmem>>, vector<1x128xf32>
    %32 = vector.broadcast %31 : vector<1x128xf32> to vector<128x128xf32>
    %33 = arith.addf %30, %32 : vector<128x128xf32>
    %cst_22 = arith.constant 5.000000e-01 : f32
    %34 = vector.broadcast %cst_22 : f32 to vector<128x128xf32>
    %35 = arith.mulf %34, %33 : vector<128x128xf32>
    %36 = math.tanh %35 : vector<128x128xf32>
    %cst_23 = arith.constant 1.000000e+00 : f32
    %37 = vector.broadcast %cst_23 : f32 to vector<128x128xf32>
    %38 = arith.addf %37, %36 : vector<128x128xf32>
    %cst_24 = arith.constant 5.000000e-01 : f32
    %39 = vector.broadcast %cst_24 : f32 to vector<128x128xf32>
    %40 = arith.mulf %39, %38 : vector<128x128xf32>
    %c0_25 = arith.constant 0 : index
    %c0_26 = arith.constant 0 : index
    %41 = vector.load %arg4[%c0_25, %c0_26] : memref<128x128xf32, #tpu.memory_space<vmem>>, vector<128x128xf32>
    %42 = arith.addf %16, %27 : vector<128x128xf32>
    %43 = arith.mulf %40, %42 : vector<128x128xf32>
    %cst_27 = arith.constant 1.000000e+00 : f32
    %44 = vector.broadcast %cst_27 : f32 to vector<128x128xf32>
    %45 = arith.subf %44, %40 : vector<128x128xf32>
    %46 = arith.mulf %45, %41 : vector<128x128xf32>
    %47 = arith.addf %43, %46 : vector<128x128xf32>
    %cst_28 = arith.constant 0.000000e+00 : f32
    %48 = vector.broadcast %cst_28 : f32 to vector<128x128xf32>
    %49 = arith.maximumf %47, %48 : vector<128x128xf32>
    %c0_29 = arith.constant 0 : index
    %c0_30 = arith.constant 0 : index
    %50 = vector.load %arg9[%c0_29, %c0_30] : memref<128x128xf32, #tpu.memory_space<vmem>>, vector<128x128xf32>
    tpu.vector_store %arg9[%c0_29, %c0_30], %49 {strides = array<i32>} : memref<128x128xf32, #tpu.memory_space<vmem>>, vector<128x128xf32>,
    return
  }
  func.func @transform_0(%arg0: i32) -> (i32, i32) {
    %c0_i32 = arith.constant 0 : i32
    %c0_i32_0 = arith.constant 0 : i32
    return %arg0, %c0_i32 : i32, i32
  }
  func.func @transform_1(%arg0: i32) -> (i32, i32) {
    %c0_i32 = arith.constant 0 : i32
    %c0_i32_0 = arith.constant 0 : i32
    return %arg0, %c0_i32 : i32, i32
  }
  func.func @transform_2(%arg0: i32) -> (i32, i32) {
    %c0_i32 = arith.constant 0 : i32
    %c0_i32_0 = arith.constant 0 : i32
    %c0_i32_1 = arith.constant 0 : i32
    return %c0_i32, %c0_i32_0 : i32, i32
  }
  func.func @transform_3(%arg0: i32) -> (i32, i32) {
    %c0_i32 = arith.constant 0 : i32
    %c0_i32_0 = arith.constant 0 : i32
    return %arg0, %c0_i32 : i32, i32
  }
  func.func @transform_4(%arg0: i32) -> (i32, i32) {
    %c0_i32 = arith.constant 0 : i32
    %c0_i32_0 = arith.constant 0 : i32
    %c0_i32_1 = arith.constant 0 : i32
    return %c0_i32, %c0_i32_0 : i32, i32
  }
  func.func @transform_5(%arg0: i32) -> (i32, i32) {
    %c0_i32 = arith.constant 0 : i32
    %c0_i32_0 = arith.constant 0 : i32
    %c0_i32_1 = arith.constant 0 : i32
    return %c0_i32, %c0_i32_0 : i32, i32
  }
  func.func @transform_6(%arg0: i32) -> (i32, i32) {
    %c0_i32 = arith.constant 0 : i32
    %c0_i32_0 = arith.constant 0 : i32
    %c0_i32_1 = arith.constant 0 : i32
    return %c0_i32, %c0_i32_0 : i32, i32
  }
  func.func @transform_7(%arg0: i32) -> (i32, i32) {
    %c0_i32 = arith.constant 0 : i32
    %c0_i32_0 = arith.constant 0 : i32
    %c0_i32_1 = arith.constant 0 : i32
    return %c0_i32, %c0_i32_0 : i32, i32
  }
  func.func @transform_8(%arg0: i32) -> (i32, i32) {
    %c0_i32 = arith.constant 0 : i32
    %c0_i32_0 = arith.constant 0 : i32
    return %arg0, %c0_i32 : i32, i32
  }
}

</mosaic_0001>

<llo_original>
// kernel: tpu_custom_call.1
$region0: #{tpu_custom_call.1}
  #allocation0 [shape = 'u32[]', space=smem, size = 0x4, offset = 0x4, fixed_abs, tag = 'smem constant byte address 0x4 - core index']
  #allocation1 [shape = 'u32[72,128]{1,0:T(1,128)}', space=vmem, size = 0x9000, scoped, tag = 'internal scratch']
  %s0 = inlined_call_operand.hbm [shape: f32[256,256], index: 0, kind: input, shape index: {}]
  %s1 = inlined_call_operand.hbm [shape: f32[256,128], index: 1, kind: input, shape index: {}]
  %s2 = inlined_call_operand.hbm [shape: f32[256,128], index: 2, kind: input, shape index: {}]
  %s3 = inlined_call_operand.hbm [shape: f32[256,128], index: 3, kind: input, shape index: {}]
  %s4 = inlined_call_operand.hbm [shape: f32[128,128], index: 4, kind: input, shape index: {}]
  %s5 = inlined_call_operand.hbm [shape: f32[128,256], index: 5, kind: input, shape index: {}]
  %s6 = inlined_call_operand.hbm [shape: f32[128,128], index: 6, kind: input, shape index: {}]
  %s7 = inlined_call_operand.vmem [shape: f32[1,128], index: 7, kind: input, shape index: {}]
  %s8 = inlined_call_operand.hbm [shape: f32[256,128], index: 8, kind: output, shape index: {}]
  %s9 = sld [smem:[#allocation0]]
  $region93: #{tpu_custom_call.1} parent=0
    _
  %s11 = ssub.s32 1, %s9
  %s12 = scalar_select 0, %s11, %s9
  $region1: #{tpu_custom_call.1} parent=0
    #allocation2 [shape = 'u8[262144]{0}', space=vmem, size = 0x40000, scoped, tag = 'input window, operand 0']
    #allocation3 [shape = 's32[2]{0}', space=sflag, size = 0x8, scoped, tag = 'scoped memory for tpu_custom_call.1']
    #allocation4 [shape = 's32[2]{0}', space=sflag, size = 0x8, scoped, tag = 'scoped memory for tpu_custom_call.1']
    #allocation5 [shape = 'u8[131072]{0}', space=vmem, size = 0x20000, scoped, tag = 'input window, operand 1']
    #allocation6 [shape = 's32[2]{0}', space=sflag, size = 0x8, scoped, tag = 'scoped memory for tpu_custom_call.1']
    #allocation7 [shape = 'u8[131072]{0}', space=vmem, size = 0x20000, scoped, tag = 'input window, operand 2, single buffered']
    #allocation8 [shape = 'u8[131072]{0}', space=vmem, size = 0x20000, scoped, tag = 'input window, operand 3']
    #allocation9 [shape = 's32[2]{0}', space=sflag, size = 0x8, scoped, tag = 'scoped memory for tpu_custom_call.1']
    #allocation10 [shape = 'u8[65536]{0}', space=vmem, size = 0x10000, scoped, tag = 'input window, operand 4, single buffered']
    #allocation11 [shape = 'u8[131072]{0}', space=vmem, size = 0x20000, scoped, tag = 'input window, operand 5, single buffered']
    #allocation12 [shape = 's32[1]{0}', space=sflag, size = 0x4, scoped, tag = 'scoped memory for tpu_custom_call.1']
    #allocation13 [shape = 'u8[65536]{0}', space=vmem, size = 0x10000, scoped, tag = 'input window, operand 6, single buffered']
    #allocation14 [shape = 'u8[131072]{0}', space=vmem, size = 0x20000, scoped, tag = 'output window, operand 0']
    %13 = vsyncpa [#allocation3], 0
    %s14 = scalar_lea.sflag [#allocation3], 1
    %15 = vsyncpa %s14, 0
    %16 = vsyncpa [#allocation6], 0
    %s17 = scalar_lea.sflag [#allocation6], 1
    %18 = vsyncpa %s17, 0
    %19 = vsyncpa [#allocation9], 0
    %s20 = scalar_lea.sflag [#allocation9], 1
    %21 = vsyncpa %s20, 0
    %22 = vsyncpa [#allocation12], 0
    %23 = vsyncpa [#allocation4], 0
    %s24 = scalar_lea.sflag [#allocation4], 1
    %25 = vsyncpa %s24, 0
    loop: start=0, step=1, limit=4
    $region2: #{tpu_custom_call.1} parent=1 // loop_pre_header
      _
    $region3: #{tpu_custom_call.1} parent=1 // loop_header
      %s27 = sphi 0, %s31
      %p28 = scmp.ge.s32.totalorder %s27, 4
      %s37 = sphi 0, %s39
      %s40 = sphi 0, %s37
      %s41 = sphi 0, %s40
      %s57 = sphi 0, %s41
      %s63 = sphi 0, %s65
      %s66 = sphi 0, %s63
      %s67 = sphi 0, %s66
      %s83 = sphi 0, %s67
      %s87 = sphi 0, %s87
      %s89 = sphi 0, %s87
      %s90 = sphi 0, %s89
      %s104 = sphi 0, %s90
      %s110 = sphi 0, %s112
      %s113 = sphi 0, %s110
      %s114 = sphi 0, %s113
      %s130 = sphi 0, %s114
      %s134 = sphi 0, %s134
      %s136 = sphi 0, %s134
      %s137 = sphi 0, %s136
      %s151 = sphi 0, %s137
      %s155 = sphi 0, %s155
      %s157 = sphi 0, %s155
      %s158 = sphi 0, %s157
      %s172 = sphi 0, %s158
      %s176 = sphi 0, %s176
      %s178 = sphi 0, %s176
      %s179 = sphi 0, %s178
      %s193 = sphi 0, %s179
      %s197 = sphi 0, %s197
      %s199 = sphi 0, %s197
      %s200 = sphi 0, %s199
      %s214 = sphi 0, %s200
      %s220 = sphi 0, %s222
      %s223 = sphi 0, %s220
      %s224 = sphi 0, %s223
      %s240 = sphi 0, %s224
    $region4: #{tpu_custom_call.1} parent=1 // loop_header_branch
      %30 = sbr.rel (%p28) target = $region8
    $region5: #{tpu_custom_call.1} parent=1 // loop_body
      %s32 = ssub.s32 %s27, 1
      %s33 = ssub.s32 %s27, 2
      %s34 = sadd.s32 %s27, 1
      %s35 = ssub.s32 %s27, %s34
      %p36 = scmp.eq.s32.totalorder %s35, 0
      %s38 = sadd.s32 %s37, 1
      %s39 = scalar_select %p36, %s37, %s38
      %p42 = pneg %p36
      %p43 = scmp.eq.s32.totalorder %s27, 1
      %p44 = por %p42, %p43
      %p45 = scmp.ne.s32.totalorder %s37, %s40
      %p46 = scmp.eq.s32.totalorder %s27, 0
      %p47 = por %p45, %p46
      %p48 = scmp.ne.s32.totalorder %s37, %s40
      %p49 = scmp.eq.s32.totalorder %s32, 1
      %p50 = por %p48, %p49
      %p51 = scmp.ne.s32.totalorder %s40, %s41
      %p52 = scmp.eq.s32.totalorder %s32, 0
      %p53 = por %p51, %p52
      %p54 = scmp.ne.s32.totalorder %s40, %s41
      %p55 = scmp.eq.s32.totalorder %s33, 1
      %p56 = por %p54, %p55
      %p58 = scmp.ne.s32.totalorder %s41, %s57
      %p59 = scmp.eq.s32.totalorder %s33, 0
      %p60 = por %p58, %p59
      %s61 = ssub.s32 %s27, %s34
      %p62 = scmp.eq.s32.totalorder %s61, 0
      %s64 = sadd.s32 %s63, 1
      %s65 = scalar_select %p62, %s63, %s64
      %p68 = pneg %p62
      %p69 = scmp.eq.s32.totalorder %s27, 1
      %p70 = por %p68, %p69
      %p71 = scmp.ne.s32.totalorder %s63, %s66
      %p72 = scmp.eq.s32.totalorder %s27, 0
      %p73 = por %p71, %p72
      %p74 = scmp.ne.s32.totalorder %s63, %s66
      %p75 = scmp.eq.s32.totalorder %s32, 1
      %p76 = por %p74, %p75
      %p77 = scmp.ne.s32.totalorder %s66, %s67
      %p78 = scmp.eq.s32.totalorder %s32, 0
      %p79 = por %p77, %p78
      %p80 = scmp.ne.s32.totalorder %s66, %s67
      %p81 = scmp.eq.s32.totalorder %s33, 1
      %p82 = por %p80, %p81
      %p84 = scmp.ne.s32.totalorder %s67, %s83
      %p85 = scmp.eq.s32.totalorder %s33, 0
      %p86 = por %p84, %p85
      %s88 = sadd.s32 %s87, 1
      %p91 = scmp.eq.s32.totalorder %s27, 1
      %p92 = scmp.ne.s32.totalorder %s87, %s89
      %p93 = scmp.eq.s32.totalorder %s27, 0
      %p94 = por %p92, %p93
      %p95 = scmp.ne.s32.totalorder %s87, %s89
      %p96 = scmp.eq.s32.totalorder %s32, 1
      %p97 = por %p95, %p96
      %p98 = scmp.ne.s32.totalorder %s89, %s90
      %p99 = scmp.eq.s32.totalorder %s32, 0
      %p100 = por %p98, %p99
      %p101 = scmp.ne.s32.totalorder %s89, %s90
      %p102 = scmp.eq.s32.totalorder %s33, 1
      %p103 = por %p101, %p102
      %p105 = scmp.ne.s32.totalorder %s90, %s104
      %p106 = scmp.eq.s32.totalorder %s33, 0
      %p107 = por %p105, %p106
      %s108 = ssub.s32 %s27, %s34
      %p109 = scmp.eq.s32.totalorder %s108, 0
      %s111 = sadd.s32 %s110, 1
      %s112 = scalar_select %p109, %s110, %s111
      %p115 = pneg %p109
      %p116 = scmp.eq.s32.totalorder %s27, 1
      %p117 = por %p115, %p116
      %p118 = scmp.ne.s32.totalorder %s110, %s113
      %p119 = scmp.eq.s32.totalorder %s27, 0
      %p120 = por %p118, %p119
      %p121 = scmp.ne.s32.totalorder %s110, %s113
      %p122 = scmp.eq.s32.totalorder %s32, 1
      %p123 = por %p121, %p122
      %p124 = scmp.ne.s32.totalorder %s113, %s114
      %p125 = scmp.eq.s32.totalorder %s32, 0
      %p126 = por %p124, %p125
      %p127 = scmp.ne.s32.totalorder %s113, %s114
      %p128 = scmp.eq.s32.totalorder %s33, 1
      %p129 = por %p127, %p128
      %p131 = scmp.ne.s32.totalorder %s114, %s130
      %p132 = scmp.eq.s32.totalorder %s33, 0
      %p133 = por %p131, %p132
      %s135 = sadd.s32 %s134, 1
      %p138 = scmp.eq.s32.totalorder %s27, 1
      %p139 = scmp.ne.s32.totalorder %s134, %s136
      %p140 = scmp.eq.s32.totalorder %s27, 0
      %p141 = por %p139, %p140
      %p142 = scmp.ne.s32.totalorder %s134, %s136
      %p143 = scmp.eq.s32.totalorder %s32, 1
      %p144 = por %p142, %p143
      %p145 = scmp.ne.s32.totalorder %s136, %s137
      %p146 = scmp.eq.s32.totalorder %s32, 0
      %p147 = por %p145, %p146
      %p148 = scmp.ne.s32.totalorder %s136, %s137
      %p149 = scmp.eq.s32.totalorder %s33, 1
      %p150 = por %p148, %p149
      %p152 = scmp.ne.s32.totalorder %s137, %s151
      %p153 = scmp.eq.s32.totalorder %s33, 0
      %p154 = por %p152, %p153
      %s156 = sadd.s32 %s155, 1
      %p159 = scmp.eq.s32.totalorder %s27, 1
      %p160 = scmp.ne.s32.totalorder %s155, %s157
      %p161 = scmp.eq.s32.totalorder %s27, 0
      %p162 = por %p160, %p161
      %p163 = scmp.ne.s32.totalorder %s155, %s157
      %p164 = scmp.eq.s32.totalorder %s32, 1
      %p165 = por %p163, %p164
      %p166 = scmp.ne.s32.totalorder %s157, %s158
      %p167 = scmp.eq.s32.totalorder %s32, 0
      %p168 = por %p166, %p167
      %p169 = scmp.ne.s32.totalorder %s157, %s158
      %p170 = scmp.eq.s32.totalorder %s33, 1
      %p171 = por %p169, %p170
      %p173 = scmp.ne.s32.totalorder %s158, %s172
      %p174 = scmp.eq.s32.totalorder %s33, 0
      %p175 = por %p173, %p174
      %s177 = sadd.s32 %s176, 1
      %p180 = scmp.eq.s32.totalorder %s27, 1
      %p181 = scmp.ne.s32.totalorder %s176, %s178
      %p182 = scmp.eq.s32.totalorder %s27, 0
      %p183 = por %p181, %p182
      %p184 = scmp.ne.s32.totalorder %s176, %s178
      %p185 = scmp.eq.s32.totalorder %s32, 1
      %p186 = por %p184, %p185
      %p187 = scmp.ne.s32.totalorder %s178, %s179
      %p188 = scmp.eq.s32.totalorder %s32, 0
      %p189 = por %p187, %p188
      %p190 = scmp.ne.s32.totalorder %s178, %s179
      %p191 = scmp.eq.s32.totalorder %s33, 1
      %p192 = por %p190, %p191
      %p194 = scmp.ne.s32.totalorder %s179, %s193
      %p195 = scmp.eq.s32.totalorder %s33, 0
      %p196 = por %p194, %p195
      %s198 = sadd.s32 %s197, 1
      %p201 = scmp.eq.s32.totalorder %s27, 1
      %p202 = scmp.ne.s32.totalorder %s197, %s199
      %p203 = scmp.eq.s32.totalorder %s27, 0
      %p204 = por %p202, %p203
      %p205 = scmp.ne.s32.totalorder %s197, %s199
      %p206 = scmp.eq.s32.totalorder %s32, 1
      %p207 = por %p205, %p206
      %p208 = scmp.ne.s32.totalorder %s199, %s200
      %p209 = scmp.eq.s32.totalorder %s32, 0
      %p210 = por %p208, %p209
      %p211 = scmp.ne.s32.totalorder %s199, %s200
      %p212 = scmp.eq.s32.totalorder %s33, 1
      %p213 = por %p211, %p212
      %p215 = scmp.ne.s32.totalorder %s200, %s214
      %p216 = scmp.eq.s32.totalorder %s33, 0
      %p217 = por %p215, %p216
      %s218 = ssub.s32 %s27, %s34
      %p219 = scmp.eq.s32.totalorder %s218, 0
      %s221 = sadd.s32 %s220, 1
      %s222 = scalar_select %p219, %s220, %s221
      %p225 = pneg %p219
      %p226 = scmp.eq.s32.totalorder %s27, 1
      %p227 = por %p225, %p226
      %p228 = scmp.ne.s32.totalorder %s220, %s223
      %p229 = scmp.eq.s32.totalorder %s27, 0
      %p230 = por %p228, %p229
      %p231 = scmp.ne.s32.totalorder %s220, %s223
      %p232 = scmp.eq.s32.totalorder %s32, 1
      %p233 = por %p231, %p232
      %p234 = scmp.ne.s32.totalorder %s223, %s224
      %p235 = scmp.eq.s32.totalorder %s32, 0
      %p236 = por %p234, %p235
      %p237 = scmp.ne.s32.totalorder %s223, %s224
      %p238 = scmp.eq.s32.totalorder %s33, 1
      %p239 = por %p237, %p238
      %p241 = scmp.ne.s32.totalorder %s224, %s240
      %p242 = scmp.eq.s32.totalorder %s33, 0
      %p243 = por %p241, %p242
      %p244 = scmp.le.s32.totalorder 1, %s27
      %p245 = scmp.lt.s32.totalorder %s27, 3
      %p246 = pnand %p244, %p245
      %p247 = pneg %p246
      // Predicated region
      $region9: #{tpu_custom_call.1} parent=5 // pred_check
        _
      $region10: #{tpu_custom_call.1} parent=5 // pred_check_branch
        %249 = sbr.rel (%p246) target = $region12
      $region11: #{tpu_custom_call.1} parent=5 // pred_region
        %s250 = ssub.s32 %s27, 1
        // Predicated region
        $region13: #{tpu_custom_call.1} parent=11 // pred_check
          %p251 = pneg %p100
        $region14: #{tpu_custom_call.1} parent=11 // pred_check_branch
          %253 = sbr.rel (%p251) target = $region16
        $region15: #{tpu_custom_call.1} parent=11 // pred_region
          %255 = vsyncadd [#allocation6], 0
          %s256 = sshll.u32 %s2, 4
          %s257 = int_to_ptr.hbm [resolvable:$true] %s256
          %s258 = sshll.u32 [#allocation7], 4
          %s259 = int_to_ptr.vmem [resolvable:$true] %s258
          %264 = dma.hbm_to_vmem [thread:$0]  %s257, 4096, %s259, [#allocation6], 128, 128, 8
        $region16: #{tpu_custom_call.1} parent=11 // pred_fallthru
          _
        // Predicated region
        $region17: #{tpu_custom_call.1} parent=11 // pred_check
          %p265 = pneg %p147
        $region18: #{tpu_custom_call.1} parent=11 // pred_check_branch
          %267 = sbr.rel (%p265) target = $region20
        $region19: #{tpu_custom_call.1} parent=11 // pred_region
          %269 = vsyncadd [#allocation9], 0
          %s270 = sshll.u32 %s4, 4
          %s271 = int_to_ptr.hbm [resolvable:$true] %s270
          %s272 = sshll.u32 [#allocation10], 4
          %s273 = int_to_ptr.vmem [resolvable:$true] %s272
          %278 = dma.hbm_to_vmem [thread:$0]  %s271, 2048, %s273, [#allocation9], 128, 128, 8
        $region20: #{tpu_custom_call.1} parent=11 // pred_fallthru
          _
        // Predicated region
        $region21: #{tpu_custom_call.1} parent=11 // pred_check
          %p279 = pneg %p168
        $region22: #{tpu_custom_call.1} parent=11 // pred_check_branch
          %281 = sbr.rel (%p279) target = $region24
        $region23: #{tpu_custom_call.1} parent=11 // pred_region
          %283 = vsyncadd [#allocation12], 0
          %s284 = sshll.u32 %s5, 4
          %s285 = int_to_ptr.hbm [resolvable:$true] %s284
          %s286 = sshll.u32 [#allocation11], 4
          %s287 = int_to_ptr.vmem [resolvable:$true] %s286
          %292 = dma.hbm_to_vmem [thread:$0]  %s285, 4096, %s287, [#allocation12], 256, 256, 16
        $region24: #{tpu_custom_call.1} parent=11 // pred_fallthru
          _
        // Predicated region
        $region25: #{tpu_custom_call.1} parent=11 // pred_check
          %p293 = pneg %p189
        $region26: #{tpu_custom_call.1} parent=11 // pred_check_branch
          %295 = sbr.rel (%p293) target = $region28
        $region27: #{tpu_custom_call.1} parent=11 // pred_region
          %297 = vsyncadd [#allocation12], 0
          %s298 = sshll.u32 %s6, 4
          %s299 = int_to_ptr.hbm [resolvable:$true] %s298
          %s300 = sshll.u32 [#allocation13], 4
          %s301 = int_to_ptr.vmem [resolvable:$true] %s300
          %306 = dma.hbm_to_vmem [thread:$0]  %s299, 2048, %s301, [#allocation12], 128, 128, 8
        $region28: #{tpu_custom_call.1} parent=11 // pred_fallthru
          _
        // Predicated region
        $region29: #{tpu_custom_call.1} parent=11 // pred_check
          %p307 = pneg %p210
        $region30: #{tpu_custom_call.1} parent=11 // pred_check_branch
          %309 = sbr.rel (%p307) target = $region32
        $region31: #{tpu_custom_call.1} parent=11 // pred_region
          _
        $region32: #{tpu_custom_call.1} parent=11 // pred_fallthru
          _
      $region12: #{tpu_custom_call.1} parent=5 // pred_fallthru
        _
      %p310 = scmp.lt.s32.totalorder %s27, 2
      // Predicated region
      $region33: #{tpu_custom_call.1} parent=5 // pred_check
        %p311 = pneg %p310
      $region34: #{tpu_custom_call.1} parent=5 // pred_check_branch
        %313 = sbr.rel (%p311) target = $region36
      $region35: #{tpu_custom_call.1} parent=5 // pred_region
        // Predicated region
        $region37: #{tpu_custom_call.1} parent=35 // pred_check
          %p314 = pneg %p47
        $region38: #{tpu_custom_call.1} parent=35 // pred_check_branch
          %316 = sbr.rel (%p314) target = $region40
        $region39: #{tpu_custom_call.1} parent=35 // pred_region
          %s317 = sand.u32 %s37, 1
          %s318 = scalar_lea.sflag [#allocation3], %s317
          %s319 = sand.u32 %s37, 1
          %s320 = smul.addr %s319, 256
          %s321 = scalar_lea.vmem [#allocation2], %s320
          %s322 = smul.u32 16, %s27
          %324 = vsyncadd %s318, 0
          %s325 = smul.addr %s322, 2
          %s326 = smul.addr %s325, 8
          %s327 = scalar_lea.hbm %s0, %s326
          %s328 = sshll.u32 %s327, 4
          %s329 = int_to_ptr.hbm [resolvable:$true] %s328
          %s330 = sshll.u32 %s321, 4
          %s331 = int_to_ptr.vmem [resolvable:$true] %s330
          %336 = dma.hbm_to_vmem [thread:$0]  %s329, 4096, %s331, %s318, 256, 256, 16
        $region40: #{tpu_custom_call.1} parent=35 // pred_fallthru
          _
        // Predicated region
        $region41: #{tpu_custom_call.1} parent=35 // pred_check
          %p337 = pneg %p73
        $region42: #{tpu_custom_call.1} parent=35 // pred_check_branch
          %339 = sbr.rel (%p337) target = $region44
        $region43: #{tpu_custom_call.1} parent=35 // pred_region
          %s340 = sand.u32 %s27, 1
          %s341 = scalar_lea.sflag [#allocation6], %s340
          %s342 = sand.u32 %s63, 1
          %s343 = smul.addr %s342, 128
          %s344 = scalar_lea.vmem [#allocation5], %s343
          %s345 = smul.u32 16, %s27
          %347 = vsyncadd %s341, 0
          %s348 = smul.addr %s345, 8
          %s349 = scalar_lea.hbm %s1, %s348
          %s350 = sshll.u32 %s349, 4
          %s351 = int_to_ptr.hbm [resolvable:$true] %s350
          %s352 = sshll.u32 %s344, 4
          %s353 = int_to_ptr.vmem [resolvable:$true] %s352
          %358 = dma.hbm_to_vmem [thread:$0]  %s351, 2048, %s353, %s341, 128, 128, 8
        $region44: #{tpu_custom_call.1} parent=35 // pred_fallthru
          _
        // Predicated region
        $region45: #{tpu_custom_call.1} parent=35 // pred_check
          %p359 = pneg %p120
        $region46: #{tpu_custom_call.1} parent=35 // pred_check_branch
          %361 = sbr.rel (%p359) target = $region48
        $region47: #{tpu_custom_call.1} parent=35 // pred_region
          %s362 = sand.u32 %s27, 1
          %s363 = scalar_lea.sflag [#allocation9], %s362
          %s364 = sand.u32 %s110, 1
          %s365 = smul.addr %s364, 128
          %s366 = scalar_lea.vmem [#allocation8], %s365
          %s367 = smul.u32 16, %s27
          %369 = vsyncadd %s363, 0
          %s370 = smul.addr %s367, 8
          %s371 = scalar_lea.hbm %s3, %s370
          %s372 = sshll.u32 %s371, 4
          %s373 = int_to_ptr.hbm [resolvable:$true] %s372
          %s374 = sshll.u32 %s366, 4
          %s375 = int_to_ptr.vmem [resolvable:$true] %s374
          %380 = dma.hbm_to_vmem [thread:$0]  %s373, 2048, %s375, %s363, 128, 128, 8
        $region48: #{tpu_custom_call.1} parent=35 // pred_fallthru
          _
      $region36: #{tpu_custom_call.1} parent=5 // pred_fallthru
        _
      %p381 = scmp.le.s32.totalorder 1, %s27
      %p382 = scmp.lt.s32.totalorder %s27, 3
      %p383 = pnand %p381, %p382
      %p384 = pneg %p383
      // Predicated region
      $region49: #{tpu_custom_call.1} parent=5 // pred_check
        _
      $region50: #{tpu_custom_call.1} parent=5 // pred_check_branch
        %386 = sbr.rel (%p383) target = $region52
      $region51: #{tpu_custom_call.1} parent=5 // pred_region
        %s387 = ssub.s32 %s27, 1
        %s388 = sand.u32 %s40, 1
        %s389 = scalar_lea.sflag [#allocation3], %s388
        %s390 = sand.u32 %s40, 1
        %s391 = smul.addr %s390, 256
        %s392 = scalar_lea.vmem [#allocation2], %s391
        // Predicated region
        $region53: #{tpu_custom_call.1} parent=51 // pred_check
          %p393 = pneg %p53
        $region54: #{tpu_custom_call.1} parent=51 // pred_check_branch
          %395 = sbr.rel (%p393) target = $region56
        $region55: #{tpu_custom_call.1} parent=51 // pred_region
          %397 = dma.done %s389, 4096
        $region56: #{tpu_custom_call.1} parent=51 // pred_fallthru
          _
        %s398 = sand.u32 %s32, 1
        %s399 = scalar_lea.sflag [#allocation6], %s398
        %s400 = sand.u32 %s66, 1
        %s401 = smul.addr %s400, 128
        %s402 = scalar_lea.vmem [#allocation5], %s401
        // Predicated region
        $region57: #{tpu_custom_call.1} parent=51 // pred_check
          %p403 = pneg %p79
        $region58: #{tpu_custom_call.1} parent=51 // pred_check_branch
          %405 = sbr.rel (%p403) target = $region60
        $region59: #{tpu_custom_call.1} parent=51 // pred_region
          %407 = dma.done %s399, 2048
        $region60: #{tpu_custom_call.1} parent=51 // pred_fallthru
          _
        // Predicated region
        $region61: #{tpu_custom_call.1} parent=51 // pred_check
          %p408 = pneg %p100
        $region62: #{tpu_custom_call.1} parent=51 // pred_check_branch
          %410 = sbr.rel (%p408) target = $region64
        $region63: #{tpu_custom_call.1} parent=51 // pred_region
          %412 = dma.done [#allocation6], 4096
        $region64: #{tpu_custom_call.1} parent=51 // pred_fallthru
          _
        %s413 = sand.u32 %s32, 1
        %s414 = scalar_lea.sflag [#allocation9], %s413
        %s415 = sand.u32 %s113, 1
        %s416 = smul.addr %s415, 128
        %s417 = scalar_lea.vmem [#allocation8], %s416
        // Predicated region
        $region65: #{tpu_custom_call.1} parent=51 // pred_check
          %p418 = pneg %p126
        $region66: #{tpu_custom_call.1} parent=51 // pred_check_branch
          %420 = sbr.rel (%p418) target = $region68
        $region67: #{tpu_custom_call.1} parent=51 // pred_region
          %422 = dma.done %s414, 2048
        $region68: #{tpu_custom_call.1} parent=51 // pred_fallthru
          _
        // Predicated region
        $region69: #{tpu_custom_call.1} parent=51 // pred_check
          %p423 = pneg %p147
        $region70: #{tpu_custom_call.1} parent=51 // pred_check_branch
          %425 = sbr.rel (%p423) target = $region72
        $region71: #{tpu_custom_call.1} parent=51 // pred_region
          %427 = dma.done [#allocation9], 2048
        $region72: #{tpu_custom_call.1} parent=51 // pred_fallthru
          _
        // Predicated region
        $region73: #{tpu_custom_call.1} parent=51 // pred_check
          %p428 = pneg %p168
        $region74: #{tpu_custom_call.1} parent=51 // pred_check_branch
          %430 = sbr.rel (%p428) target = $region76
        $region75: #{tpu_custom_call.1} parent=51 // pred_region
          %432 = dma.done [#allocation12], 4096
        $region76: #{tpu_custom_call.1} parent=51 // pred_fallthru
          _
        // Predicated region
        $region77: #{tpu_custom_call.1} parent=51 // pred_check
          %p433 = pneg %p189
        $region78: #{tpu_custom_call.1} parent=51 // pred_check_branch
          %435 = sbr.rel (%p433) target = $region80
        $region79: #{tpu_custom_call.1} parent=51 // pred_region
          %437 = dma.done [#allocation12], 2048
        $region80: #{tpu_custom_call.1} parent=51 // pred_fallthru
          _
        %s438 = sand.u32 %s40, 1
        %s439 = scalar_lea.sflag [#allocation3], %s438
        %s440 = sand.u32 %s40, 1
        %s441 = smul.addr %s440, 256
        %s442 = scalar_lea.vmem [#allocation2], %s441
        %p443 = pneg %p53
        %p444 = pneg %p50
        %s445 = sand.u32 %s32, 1
        %s446 = scalar_lea.sflag [#allocation6], %s445
        %s447 = sand.u32 %s66, 1
        %s448 = smul.addr %s447, 128
        %s449 = scalar_lea.vmem [#allocation5], %s448
        %p450 = pneg %p79
        %p451 = pneg %p76
        %p452 = pneg %p100
        %p453 = pneg %p97
        %s454 = sand.u32 %s32, 1
        %s455 = scalar_lea.sflag [#allocation9], %s454
        %s456 = sand.u32 %s113, 1
        %s457 = smul.addr %s456, 128
        %s458 = scalar_lea.vmem [#allocation8], %s457
        %p459 = pneg %p126
        %p460 = pneg %p123
        %p461 = pneg %p147
        %p462 = pneg %p144
        %p463 = pneg %p168
        %p464 = pneg %p165
        %p465 = pneg %p189
        %p466 = pneg %p186
        %p467 = pneg %p210
        %p468 = pneg %p207
        %p469 = pneg %p236
        %p470 = pneg %p233
        %s471 = sand.u32 %s223, 1
        %s472 = scalar_lea.sflag [#allocation4], %s471
        %s473 = sand.u32 %s223, 1
        %s474 = smul.addr %s473, 128
        %s475 = scalar_lea.vmem [#allocation14], %s474
        %s476 = smul.u32 16, %s32
        %s477 = smul.u32 16, %s32
        %s478 = smul.u32 16, %s32
        %s479 = smul.u32 16, %s32
        %v480 = vld [vmem:[%s392] sm:$0xff]
        %v481 = vld [vmem:[%s392 + $0x8] sm:$0xff]
        %v482 = vld [vmem:[%s392 + $0x10] sm:$0xff]
        %v483 = vld [vmem:[%s392 + $0x18] sm:$0xff]
        %v484 = vld [vmem:[%s392 + $0x20] sm:$0xff]
        %v485 = vld [vmem:[%s392 + $0x28] sm:$0xff]
        %v486 = vld [vmem:[%s392 + $0x30] sm:$0xff]
        %v487 = vld [vmem:[%s392 + $0x38] sm:$0xff]
        %v488 = vld [vmem:[%s392 + $0x40] sm:$0xff]
        %v489 = vld [vmem:[%s392 + $0x48] sm:$0xff]
        %v490 = vld [vmem:[%s392 + $0x50] sm:$0xff]
        %v491 = vld [vmem:[%s392 + $0x58] sm:$0xff]
        %v492 = vld [vmem:[%s392 + $0x60] sm:$0xff]
        %v493 = vld [vmem:[%s392 + $0x68] sm:$0xff]
        %v494 = vld [vmem:[%s392 + $0x70] sm:$0xff]
        %v495 = vld [vmem:[%s392 + $0x78] sm:$0xff]
        %v496 = vld [vmem:[%s392 + $0x80] sm:$0xff]
        %v497 = vld [vmem:[%s392 + $0x88] sm:$0xff]
        %v498 = vld [vmem:[%s392 + $0x90] sm:$0xff]
        %v499 = vld [vmem:[%s392 + $0x98] sm:$0xff]
        %v500 = vld [vmem:[%s392 + $0xa0] sm:$0xff]
        %v501 = vld [vmem:[%s392 + $0xa8] sm:$0xff]
        %v502 = vld [vmem:[%s392 + $0xb0] sm:$0xff]
        %v503 = vld [vmem:[%s392 + $0xb8] sm:$0xff]
        %v504 = vld [vmem:[%s392 + $0xc0] sm:$0xff]
        %v505 = vld [vmem:[%s392 + $0xc8] sm:$0xff]
        %v506 = vld [vmem:[%s392 + $0xd0] sm:$0xff]
        %v507 = vld [vmem:[%s392 + $0xd8] sm:$0xff]
        %v508 = vld [vmem:[%s392 + $0xe0] sm:$0xff]
        %v509 = vld [vmem:[%s392 + $0xe8] sm:$0xff]
        %v510 = vld [vmem:[%s392 + $0xf0] sm:$0xff]
        %v511 = vld [vmem:[%s392 + $0xf8] sm:$0xff]
        %v512 = vld [vmem:[#allocation7] sm:$0xff]
        %v513 = vld [vmem:[#allocation7 + $0x8] sm:$0xff]
        %v514 = vld [vmem:[#allocation7 + $0x10] sm:$0xff]
        %v515 = vld [vmem:[#allocation7 + $0x18] sm:$0xff]
        %v516 = vld [vmem:[#allocation7 + $0x20] sm:$0xff]
        %v517 = vld [vmem:[#allocation7 + $0x28] sm:$0xff]
        %v518 = vld [vmem:[#allocation7 + $0x30] sm:$0xff]
        %v519 = vld [vmem:[#allocation7 + $0x38] sm:$0xff]
        %v520 = vld [vmem:[#allocation7 + $0x40] sm:$0xff]
        %v521 = vld [vmem:[#allocation7 + $0x48] sm:$0xff]
        %v522 = vld [vmem:[#allocation7 + $0x50] sm:$0xff]
        %v523 = vld [vmem:[#allocation7 + $0x58] sm:$0xff]
        %v524 = vld [vmem:[#allocation7 + $0x60] sm:$0xff]
        %v525 = vld [vmem:[#allocation7 + $0x68] sm:$0xff]
        %v526 = vld [vmem:[#allocation7 + $0x70] sm:$0xff]
        %v527 = vld [vmem:[#allocation7 + $0x78] sm:$0xff]
        %v528 = vld [vmem:[#allocation7 + $0x80] sm:$0xff]
        %v529 = vld [vmem:[#allocation7 + $0x88] sm:$0xff]
        %v530 = vld [vmem:[#allocation7 + $0x90] sm:$0xff]
        %v531 = vld [vmem:[#allocation7 + $0x98] sm:$0xff]
        %v532 = vld [vmem:[#allocation7 + $0xa0] sm:$0xff]
        %v533 = vld [vmem:[#allocation7 + $0xa8] sm:$0xff]
        %v534 = vld [vmem:[#allocation7 + $0xb0] sm:$0xff]
        %v535 = vld [vmem:[#allocation7 + $0xb8] sm:$0xff]
        %v536 = vld [vmem:[#allocation7 + $0xc0] sm:$0xff]
        %v537 = vld [vmem:[#allocation7 + $0xc8] sm:$0xff]
        %v538 = vld [vmem:[#allocation7 + $0xd0] sm:$0xff]
        %v539 = vld [vmem:[#allocation7 + $0xd8] sm:$0xff]
        %v540 = vld [vmem:[#allocation7 + $0xe0] sm:$0xff]
        %v541 = vld [vmem:[#allocation7 + $0xe8] sm:$0xff]
        %v542 = vld [vmem:[#allocation7 + $0xf0] sm:$0xff]
        %v543 = vld [vmem:[#allocation7 + $0xf8] sm:$0xff]
        %544 = vmatpush.msra.mxu0 %v527
        %545 = vmatpush.msra.mxu0 %v526
        %546 = vmatpush.msra.mxu0 %v525
        %547 = vmatpush.msra.mxu0 %v524
        %548 = vmatpush.msra.mxu0 %v523
        %549 = vmatpush.msra.mxu0 %v522
        %550 = vmatpush.msra.mxu0 %v521
        %551 = vmatpush.msra.mxu0 %v520
        %552 = vmatpush.msra.mxu0 %v519
        %553 = vmatpush.msra.mxu0 %v518
        %554 = vmatpush.msra.mxu0 %v517
        %555 = vmatpush.msra.mxu0 %v516
        %556 = vmatpush.msra.mxu0 %v515
        %557 = vmatpush.msra.mxu0 %v514
        %558 = vmatpush.msra.mxu0 %v513
        %559 = vmatpush.msra.mxu0 %v512
        %560 = vmatmul.f32.gmra.mxu0 %v480
        %v561 = vpop.f32.mrf.mxu0
        %v562 = vadd.f32 0.0, %v561
        %563 = vmatmul.f32.gmra.mxu0 %v482
        %v564 = vpop.f32.mrf.mxu0
        %v565 = vadd.f32 0.0, %v564
        %566 = vmatmul.f32.gmra.mxu0 %v484
        %v567 = vpop.f32.mrf.mxu0
        %v568 = vadd.f32 0.0, %v567
        %569 = vmatmul.f32.gmra.mxu0 %v486
        %v570 = vpop.f32.mrf.mxu0
        %v571 = vadd.f32 0.0, %v570
        %572 = vmatmul.f32.gmra.mxu0 %v488
        %v573 = vpop.f32.mrf.mxu0
        %v574 = vadd.f32 0.0, %v573
        %575 = vmatmul.f32.gmra.mxu0 %v490
        %v576 = vpop.f32.mrf.mxu0
        %v577 = vadd.f32 0.0, %v576
        %578 = vmatmul.f32.gmra.mxu0 %v492
        %v579 = vpop.f32.mrf.mxu0
        %v580 = vadd.f32 0.0, %v579
        %581 = vmatmul.f32.gmra.mxu0 %v494
        %v582 = vpop.f32.mrf.mxu0
        %v583 = vadd.f32 0.0, %v582
        %584 = vmatmul.f32.gmra.mxu0 %v496
        %v585 = vpop.f32.mrf.mxu0
        %v586 = vadd.f32 0.0, %v585
        %587 = vmatmul.f32.gmra.mxu0 %v498
        %v588 = vpop.f32.mrf.mxu0
        %v589 = vadd.f32 0.0, %v588
        %590 = vmatmul.f32.gmra.mxu0 %v500
        %v591 = vpop.f32.mrf.mxu0
        %v592 = vadd.f32 0.0, %v591
        %593 = vmatmul.f32.gmra.mxu0 %v502
        %v594 = vpop.f32.mrf.mxu0
        %v595 = vadd.f32 0.0, %v594
        %596 = vmatmul.f32.gmra.mxu0 %v504
        %v597 = vpop.f32.mrf.mxu0
        %v598 = vadd.f32 0.0, %v597
        %599 = vmatmul.f32.gmra.mxu0 %v506
        %v600 = vpop.f32.mrf.mxu0
        %v601 = vadd.f32 0.0, %v600
        %602 = vmatmul.f32.gmra.mxu0 %v508
        %v603 = vpop.f32.mrf.mxu0
        %v604 = vadd.f32 0.0, %v603
        %605 = vmatmul.f32.gmra.mxu0 %v510
        %v606 = vpop.f32.mrf.mxu0
        %v607 = vadd.f32 0.0, %v606
        %608 = vdwg.mxu0
        %609 = vmatpush.msra.mxu0 %v543
        %610 = vmatpush.msra.mxu0 %v542
        %611 = vmatpush.msra.mxu0 %v541
        %612 = vmatpush.msra.mxu0 %v540
        %613 = vmatpush.msra.mxu0 %v539
        %614 = vmatpush.msra.mxu0 %v538
        %615 = vmatpush.msra.mxu0 %v537
        %616 = vmatpush.msra.mxu0 %v536
        %617 = vmatpush.msra.mxu0 %v535
        %618 = vmatpush.msra.mxu0 %v534
        %619 = vmatpush.msra.mxu0 %v533
        %620 = vmatpush.msra.mxu0 %v532
        %621 = vmatpush.msra.mxu0 %v531
        %622 = vmatpush.msra.mxu0 %v530
        %623 = vmatpush.msra.mxu0 %v529
        %624 = vmatpush.msra.mxu0 %v528
        %625 = vmatmul.f32.gmra.mxu0 %v481
        %v626 = vpop.f32.mrf.mxu0
        %v627 = vadd.f32 %v562, %v626
        %628 = vmatmul.f32.gmra.mxu0 %v483
        %v629 = vpop.f32.mrf.mxu0
        %v630 = vadd.f32 %v565, %v629
        %631 = vmatmul.f32.gmra.mxu0 %v485
        %v632 = vpop.f32.mrf.mxu0
        %v633 = vadd.f32 %v568, %v632
        %634 = vmatmul.f32.gmra.mxu0 %v487
        %v635 = vpop.f32.mrf.mxu0
        %v636 = vadd.f32 %v571, %v635
        %637 = vmatmul.f32.gmra.mxu0 %v489
        %v638 = vpop.f32.mrf.mxu0
        %v639 = vadd.f32 %v574, %v638
        %640 = vmatmul.f32.gmra.mxu0 %v491
        %v641 = vpop.f32.mrf.mxu0
        %v642 = vadd.f32 %v577, %v641
        %643 = vmatmul.f32.gmra.mxu0 %v493
        %v644 = vpop.f32.mrf.mxu0
        %v645 = vadd.f32 %v580, %v644
        %646 = vmatmul.f32.gmra.mxu0 %v495
        %v647 = vpop.f32.mrf.mxu0
        %v648 = vadd.f32 %v583, %v647
        %649 = vmatmul.f32.gmra.mxu0 %v497
        %v650 = vpop.f32.mrf.mxu0
        %v651 = vadd.f32 %v586, %v650
        %652 = vmatmul.f32.gmra.mxu0 %v499
        %v653 = vpop.f32.mrf.mxu0
        %v654 = vadd.f32 %v589, %v653
        %655 = vmatmul.f32.gmra.mxu0 %v501
        %v656 = vpop.f32.mrf.mxu0
        %v657 = vadd.f32 %v592, %v656
        %658 = vmatmul.f32.gmra.mxu0 %v503
        %v659 = vpop.f32.mrf.mxu0
        %v660 = vadd.f32 %v595, %v659
        %661 = vmatmul.f32.gmra.mxu0 %v505
        %v662 = vpop.f32.mrf.mxu0
        %v663 = vadd.f32 %v598, %v662
        %664 = vmatmul.f32.gmra.mxu0 %v507
        %v665 = vpop.f32.mrf.mxu0
        %v666 = vadd.f32 %v601, %v665
        %667 = vmatmul.f32.gmra.mxu0 %v509
        %v668 = vpop.f32.mrf.mxu0
        %v669 = vadd.f32 %v604, %v668
        %670 = vmatmul.f32.gmra.mxu0 %v511
        %v671 = vpop.f32.mrf.mxu0
        %v672 = vadd.f32 %v607, %v671
        %673 = vdwg.mxu0
        %vm674 = vcmp.gt.f32.partialorder %v627, 0.0
        %vm675 = vcmp.gt.f32.partialorder %v630, 0.0
        %vm676 = vcmp.gt.f32.partialorder %v633, 0.0
        %vm677 = vcmp.gt.f32.partialorder %v636, 0.0
        %vm678 = vcmp.gt.f32.partialorder %v639, 0.0
        %vm679 = vcmp.gt.f32.partialorder %v642, 0.0
        %vm680 = vcmp.gt.f32.partialorder %v645, 0.0
        %vm681 = vcmp.gt.f32.partialorder %v648, 0.0
        %vm682 = vcmp.gt.f32.partialorder %v651, 0.0
        %vm683 = vcmp.gt.f32.partialorder %v654, 0.0
        %vm684 = vcmp.gt.f32.partialorder %v657, 0.0
        %vm685 = vcmp.gt.f32.partialorder %v660, 0.0
        %vm686 = vcmp.gt.f32.partialorder %v663, 0.0
        %vm687 = vcmp.gt.f32.partialorder %v666, 0.0
        %vm688 = vcmp.gt.f32.partialorder %v669, 0.0
        %vm689 = vcmp.gt.f32.partialorder %v672, 0.0
        %v690 = vmax.f32 %v627, 1.0
        %v691 = vmax.f32 %v630, 1.0
        %v692 = vmax.f32 %v633, 1.0
        %v693 = vmax.f32 %v636, 1.0
        %v694 = vmax.f32 %v639, 1.0
        %v695 = vmax.f32 %v642, 1.0
        %v696 = vmax.f32 %v645, 1.0
        %v697 = vmax.f32 %v648, 1.0
        %v698 = vmax.f32 %v651, 1.0
        %v699 = vmax.f32 %v654, 1.0
        %v700 = vmax.f32 %v657, 1.0
        %v701 = vmax.f32 %v660, 1.0
        %v702 = vmax.f32 %v663, 1.0
        %v703 = vmax.f32 %v666, 1.0
        %v704 = vmax.f32 %v669, 1.0
        %v705 = vmax.f32 %v672, 1.0
        %v706 = vrcp.pop %v690
        %v707 = vrcp.pop %v691
        %v708 = vrcp.pop %v692
        %v709 = vrcp.pop %v693
        %v710 = vrcp.pop %v694
        %v711 = vrcp.pop %v695
        %v712 = vrcp.pop %v696
        %v713 = vrcp.pop %v697
        %v714 = vrcp.pop %v698
        %v715 = vrcp.pop %v699
        %v716 = vrcp.pop %v700
        %v717 = vrcp.pop %v701
        %v718 = vrcp.pop %v702
        %v719 = vrcp.pop %v703
        %v720 = vrcp.pop %v704
        %v721 = vrcp.pop %v705
        %v722 = vsel %vm674, %v706, 1.0
        %v723 = vsel %vm675, %v707, 1.0
        %v724 = vsel %vm676, %v708, 1.0
        %v725 = vsel %vm677, %v709, 1.0
        %v726 = vsel %vm678, %v710, 1.0
        %v727 = vsel %vm679, %v711, 1.0
        %v728 = vsel %vm680, %v712, 1.0
        %v729 = vsel %vm681, %v713, 1.0
        %v730 = vsel %vm682, %v714, 1.0
        %v731 = vsel %vm683, %v715, 1.0
        %v732 = vsel %vm684, %v716, 1.0
        %v733 = vsel %vm685, %v717, 1.0
        %v734 = vsel %vm686, %v718, 1.0
        %v735 = vsel %vm687, %v719, 1.0
        %v736 = vsel %vm688, %v720, 1.0
        %v737 = vsel %vm689, %v721, 1.0
        %v738 = vld [vmem:[%s402] sm:$0xff]
        %v739 = vld [vmem:[%s402 + $0x8] sm:$0xff]
        %v740 = vld [vmem:[%s402 + $0x10] sm:$0xff]
        %v741 = vld [vmem:[%s402 + $0x18] sm:$0xff]
        %v742 = vld [vmem:[%s402 + $0x20] sm:$0xff]
        %v743 = vld [vmem:[%s402 + $0x28] sm:$0xff]
        %v744 = vld [vmem:[%s402 + $0x30] sm:$0xff]
        %v745 = vld [vmem:[%s402 + $0x38] sm:$0xff]
        %v746 = vld [vmem:[%s402 + $0x40] sm:$0xff]
        %v747 = vld [vmem:[%s402 + $0x48] sm:$0xff]
        %v748 = vld [vmem:[%s402 + $0x50] sm:$0xff]
        %v749 = vld [vmem:[%s402 + $0x58] sm:$0xff]
        %v750 = vld [vmem:[%s402 + $0x60] sm:$0xff]
        %v751 = vld [vmem:[%s402 + $0x68] sm:$0xff]
        %v752 = vld [vmem:[%s402 + $0x70] sm:$0xff]
        %v753 = vld [vmem:[%s402 + $0x78] sm:$0xff]
        %v754 = vadd.f32 %v627, %v738
        %v755 = vadd.f32 %v630, %v739
        %v756 = vadd.f32 %v633, %v740
        %v757 = vadd.f32 %v636, %v741
        %v758 = vadd.f32 %v639, %v742
        %v759 = vadd.f32 %v642, %v743
        %v760 = vadd.f32 %v645, %v744
        %v761 = vadd.f32 %v648, %v745
        %v762 = vadd.f32 %v651, %v746
        %v763 = vadd.f32 %v654, %v747
        %v764 = vadd.f32 %v657, %v748
        %v765 = vadd.f32 %v660, %v749
        %v766 = vadd.f32 %v663, %v750
        %v767 = vadd.f32 %v666, %v751
        %v768 = vadd.f32 %v669, %v752
        %v769 = vadd.f32 %v672, %v753
        %v770 = vld [vmem:[#allocation10] sm:$0xff]
        %v771 = vld [vmem:[#allocation10 + $0x8] sm:$0xff]
        %v772 = vld [vmem:[#allocation10 + $0x10] sm:$0xff]
        %v773 = vld [vmem:[#allocation10 + $0x18] sm:$0xff]
        %v774 = vld [vmem:[#allocation10 + $0x20] sm:$0xff]
        %v775 = vld [vmem:[#allocation10 + $0x28] sm:$0xff]
        %v776 = vld [vmem:[#allocation10 + $0x30] sm:$0xff]
        %v777 = vld [vmem:[#allocation10 + $0x38] sm:$0xff]
        %v778 = vld [vmem:[#allocation10 + $0x40] sm:$0xff]
        %v779 = vld [vmem:[#allocation10 + $0x48] sm:$0xff]
        %v780 = vld [vmem:[#allocation10 + $0x50] sm:$0xff]
        %v781 = vld [vmem:[#allocation10 + $0x58] sm:$0xff]
        %v782 = vld [vmem:[#allocation10 + $0x60] sm:$0xff]
        %v783 = vld [vmem:[#allocation10 + $0x68] sm:$0xff]
        %v784 = vld [vmem:[#allocation10 + $0x70] sm:$0xff]
        %v785 = vld [vmem:[#allocation10 + $0x78] sm:$0xff]
        %786 = vmatpush.msra.mxu0 %v785
        %787 = vmatpush.msra.mxu0 %v784
        %788 = vmatpush.msra.mxu0 %v783
        %789 = vmatpush.msra.mxu0 %v782
        %790 = vmatpush.msra.mxu0 %v781
        %791 = vmatpush.msra.mxu0 %v780
        %792 = vmatpush.msra.mxu0 %v779
        %793 = vmatpush.msra.mxu0 %v778
        %794 = vmatpush.msra.mxu0 %v777
        %795 = vmatpush.msra.mxu0 %v776
        %796 = vmatpush.msra.mxu0 %v775
        %797 = vmatpush.msra.mxu0 %v774
        %798 = vmatpush.msra.mxu0 %v773
        %799 = vmatpush.msra.mxu0 %v772
        %800 = vmatpush.msra.mxu0 %v771
        %801 = vmatpush.msra.mxu0 %v770
        %802 = vmatmul.f32.gmra.mxu0 %v754
        %v803 = vpop.f32.mrf.mxu0
        %v804 = vadd.f32 0.0, %v803
        %805 = vmatmul.f32.gmra.mxu0 %v755
        %v806 = vpop.f32.mrf.mxu0
        %v807 = vadd.f32 0.0, %v806
        %808 = vmatmul.f32.gmra.mxu0 %v756
        %v809 = vpop.f32.mrf.mxu0
        %v810 = vadd.f32 0.0, %v809
        %811 = vmatmul.f32.gmra.mxu0 %v757
        %v812 = vpop.f32.mrf.mxu0
        %v813 = vadd.f32 0.0, %v812
        %814 = vmatmul.f32.gmra.mxu0 %v758
        %v815 = vpop.f32.mrf.mxu0
        %v816 = vadd.f32 0.0, %v815
        %817 = vmatmul.f32.gmra.mxu0 %v759
        %v818 = vpop.f32.mrf.mxu0
        %v819 = vadd.f32 0.0, %v818
        %820 = vmatmul.f32.gmra.mxu0 %v760
        %v821 = vpop.f32.mrf.mxu0
        %v822 = vadd.f32 0.0, %v821
        %823 = vmatmul.f32.gmra.mxu0 %v761
        %v824 = vpop.f32.mrf.mxu0
        %v825 = vadd.f32 0.0, %v824
        %826 = vmatmul.f32.gmra.mxu0 %v762
        %v827 = vpop.f32.mrf.mxu0
        %v828 = vadd.f32 0.0, %v827
        %829 = vmatmul.f32.gmra.mxu0 %v763
        %v830 = vpop.f32.mrf.mxu0
        %v831 = vadd.f32 0.0, %v830
        %832 = vmatmul.f32.gmra.mxu0 %v764
        %v833 = vpop.f32.mrf.mxu0
        %v834 = vadd.f32 0.0, %v833
        %835 = vmatmul.f32.gmra.mxu0 %v765
        %v836 = vpop.f32.mrf.mxu0
        %v837 = vadd.f32 0.0, %v836
        %838 = vmatmul.f32.gmra.mxu0 %v766
        %v839 = vpop.f32.mrf.mxu0
        %v840 = vadd.f32 0.0, %v839
        %841 = vmatmul.f32.gmra.mxu0 %v767
        %v842 = vpop.f32.mrf.mxu0
        %v843 = vadd.f32 0.0, %v842
        %844 = vmatmul.f32.gmra.mxu0 %v768
        %v845 = vpop.f32.mrf.mxu0
        %v846 = vadd.f32 0.0, %v845
        %847 = vmatmul.f32.gmra.mxu0 %v769
        %v848 = vpop.f32.mrf.mxu0
        %v849 = vadd.f32 0.0, %v848
        %850 = vdwg.mxu0
        %852 = vset.pattern.permute.xlu0 32
        %853 = vperm.xlu0 %852, %v722
        %v854 = vpop.permute.xlu0 %853
        %857 = vset.pattern.permute.xlu0 32
        %858 = vperm.xlu0 %857, %v723
        %v859 = vpop.permute.xlu0 %858
        %862 = vset.pattern.permute.xlu0 32
        %863 = vperm.xlu0 %862, %v724
        %v864 = vpop.permute.xlu0 %863
        %867 = vset.pattern.permute.xlu0 32
        %868 = vperm.xlu0 %867, %v725
        %v869 = vpop.permute.xlu0 %868
        %872 = vset.pattern.permute.xlu0 32
        %873 = vperm.xlu0 %872, %v726
        %v874 = vpop.permute.xlu0 %873
        %877 = vset.pattern.permute.xlu0 32
        %878 = vperm.xlu0 %877, %v727
        %v879 = vpop.permute.xlu0 %878
        %882 = vset.pattern.permute.xlu0 32
        %883 = vperm.xlu0 %882, %v728
        %v884 = vpop.permute.xlu0 %883
        %887 = vset.pattern.permute.xlu0 32
        %888 = vperm.xlu0 %887, %v729
        %v889 = vpop.permute.xlu0 %888
        %892 = vset.pattern.permute.xlu0 32
        %893 = vperm.xlu0 %892, %v730
        %v894 = vpop.permute.xlu0 %893
        %897 = vset.pattern.permute.xlu0 32
        %898 = vperm.xlu0 %897, %v731
        %v899 = vpop.permute.xlu0 %898
        %902 = vset.pattern.permute.xlu0 32
        %903 = vperm.xlu0 %902, %v732
        %v904 = vpop.permute.xlu0 %903
        %907 = vset.pattern.permute.xlu0 32
        %908 = vperm.xlu0 %907, %v733
        %v909 = vpop.permute.xlu0 %908
        %912 = vset.pattern.permute.xlu0 32
        %913 = vperm.xlu0 %912, %v734
        %v914 = vpop.permute.xlu0 %913
        %917 = vset.pattern.permute.xlu0 32
        %918 = vperm.xlu0 %917, %v735
        %v919 = vpop.permute.xlu0 %918
        %922 = vset.pattern.permute.xlu0 32
        %923 = vperm.xlu0 %922, %v736
        %v924 = vpop.permute.xlu0 %923
        %927 = vset.pattern.permute.xlu0 32
        %928 = vperm.xlu0 %927, %v737
        %v929 = vpop.permute.xlu0 %928
        %v931 = vmul.f32 %v804, %v854
        %v932 = vmul.f32 %v807, %v859
        %v933 = vmul.f32 %v810, %v864
        %v934 = vmul.f32 %v813, %v869
        %v935 = vmul.f32 %v816, %v874
        %v936 = vmul.f32 %v819, %v879
        %v937 = vmul.f32 %v822, %v884
        %v938 = vmul.f32 %v825, %v889
        %v939 = vmul.f32 %v828, %v894
        %v940 = vmul.f32 %v831, %v899
        %v941 = vmul.f32 %v834, %v904
        %v942 = vmul.f32 %v837, %v909
        %v943 = vmul.f32 %v840, %v914
        %v944 = vmul.f32 %v843, %v919
        %v945 = vmul.f32 %v846, %v924
        %v946 = vmul.f32 %v849, %v929
        %s947 = smul.u32 %s32, 128
        %s948 = scalar_lea.vmem [#allocation7], %s947
        %v949 = vld [vmem:[%s948] sm:$0xff]
        %v950 = vld [vmem:[%s948 + $0x8] sm:$0xff]
        %v951 = vld [vmem:[%s948 + $0x10] sm:$0xff]
        %v952 = vld [vmem:[%s948 + $0x18] sm:$0xff]
        %v953 = vld [vmem:[%s948 + $0x20] sm:$0xff]
        %v954 = vld [vmem:[%s948 + $0x28] sm:$0xff]
        %v955 = vld [vmem:[%s948 + $0x30] sm:$0xff]
        %v956 = vld [vmem:[%s948 + $0x38] sm:$0xff]
        %v957 = vld [vmem:[%s948 + $0x40] sm:$0xff]
        %v958 = vld [vmem:[%s948 + $0x48] sm:$0xff]
        %v959 = vld [vmem:[%s948 + $0x50] sm:$0xff]
        %v960 = vld [vmem:[%s948 + $0x58] sm:$0xff]
        %v961 = vld [vmem:[%s948 + $0x60] sm:$0xff]
        %v962 = vld [vmem:[%s948 + $0x68] sm:$0xff]
        %v963 = vld [vmem:[%s948 + $0x70] sm:$0xff]
        %v964 = vld [vmem:[%s948 + $0x78] sm:$0xff]
        %v965 = vld [vmem:[#allocation11] sm:$0xff]
        %v966 = vld [vmem:[#allocation11 + $0x8] sm:$0xff]
        %v967 = vld [vmem:[#allocation11 + $0x10] sm:$0xff]
        %v968 = vld [vmem:[#allocation11 + $0x18] sm:$0xff]
        %v969 = vld [vmem:[#allocation11 + $0x20] sm:$0xff]
        %v970 = vld [vmem:[#allocation11 + $0x28] sm:$0xff]
        %v971 = vld [vmem:[#allocation11 + $0x30] sm:$0xff]
        %v972 = vld [vmem:[#allocation11 + $0x38] sm:$0xff]
        %v973 = vld [vmem:[#allocation11 + $0x40] sm:$0xff]
        %v974 = vld [vmem:[#allocation11 + $0x48] sm:$0xff]
        %v975 = vld [vmem:[#allocation11 + $0x50] sm:$0xff]
        %v976 = vld [vmem:[#allocation11 + $0x58] sm:$0xff]
        %v977 = vld [vmem:[#allocation11 + $0x60] sm:$0xff]
        %v978 = vld [vmem:[#allocation11 + $0x68] sm:$0xff]
        %v979 = vld [vmem:[#allocation11 + $0x70] sm:$0xff]
        %v980 = vld [vmem:[#allocation11 + $0x78] sm:$0xff]
        %v981 = vld [vmem:[#allocation11 + $0x80] sm:$0xff]
        %v982 = vld [vmem:[#allocation11 + $0x88] sm:$0xff]
        %v983 = vld [vmem:[#allocation11 + $0x90] sm:$0xff]
        %v984 = vld [vmem:[#allocation11 + $0x98] sm:$0xff]
        %v985 = vld [vmem:[#allocation11 + $0xa0] sm:$0xff]
        %v986 = vld [vmem:[#allocation11 + $0xa8] sm:$0xff]
        %v987 = vld [vmem:[#allocation11 + $0xb0] sm:$0xff]
        %v988 = vld [vmem:[#allocation11 + $0xb8] sm:$0xff]
        %v989 = vld [vmem:[#allocation11 + $0xc0] sm:$0xff]
        %v990 = vld [vmem:[#allocation11 + $0xc8] sm:$0xff]
        %v991 = vld [vmem:[#allocation11 + $0xd0] sm:$0xff]
        %v992 = vld [vmem:[#allocation11 + $0xd8] sm:$0xff]
        %v993 = vld [vmem:[#allocation11 + $0xe0] sm:$0xff]
        %v994 = vld [vmem:[#allocation11 + $0xe8] sm:$0xff]
        %v995 = vld [vmem:[#allocation11 + $0xf0] sm:$0xff]
        %v996 = vld [vmem:[#allocation11 + $0xf8] sm:$0xff]
        %997 = vmatpush.msra.mxu0 %v995
        %998 = vmatpush.msra.mxu0 %v993
        %999 = vmatpush.msra.mxu0 %v991
        %1000 = vmatpush.msra.mxu0 %v989
        %1001 = vmatpush.msra.mxu0 %v987
        %1002 = vmatpush.msra.mxu0 %v985
        %1003 = vmatpush.msra.mxu0 %v983
        %1004 = vmatpush.msra.mxu0 %v981
        %1005 = vmatpush.msra.mxu0 %v979
        %1006 = vmatpush.msra.mxu0 %v977
        %1007 = vmatpush.msra.mxu0 %v975
        %1008 = vmatpush.msra.mxu0 %v973
        %1009 = vmatpush.msra.mxu0 %v971
        %1010 = vmatpush.msra.mxu0 %v969
        %1011 = vmatpush.msra.mxu0 %v967
        %1012 = vmatpush.msra.mxu0 %v965
        %1013 = vmatmul.f32.gmra.mxu0 %v949
        %v1014 = vpop.f32.mrf.mxu0
        %v1015 = vadd.f32 0.0, %v1014
        %1016 = vmatmul.f32.gmra.mxu0 %v950
        %v1017 = vpop.f32.mrf.mxu0
        %v1018 = vadd.f32 0.0, %v1017
        %1019 = vmatmul.f32.gmra.mxu0 %v951
        %v1020 = vpop.f32.mrf.mxu0
        %v1021 = vadd.f32 0.0, %v1020
        %1022 = vmatmul.f32.gmra.mxu0 %v952
        %v1023 = vpop.f32.mrf.mxu0
        %v1024 = vadd.f32 0.0, %v1023
        %1025 = vmatmul.f32.gmra.mxu0 %v953
        %v1026 = vpop.f32.mrf.mxu0
        %v1027 = vadd.f32 0.0, %v1026
        %1028 = vmatmul.f32.gmra.mxu0 %v954
        %v1029 = vpop.f32.mrf.mxu0
        %v1030 = vadd.f32 0.0, %v1029
        %1031 = vmatmul.f32.gmra.mxu0 %v955
        %v1032 = vpop.f32.mrf.mxu0
        %v1033 = vadd.f32 0.0, %v1032
        %1034 = vmatmul.f32.gmra.mxu0 %v956
        %v1035 = vpop.f32.mrf.mxu0
        %v1036 = vadd.f32 0.0, %v1035
        %1037 = vmatmul.f32.gmra.mxu0 %v957
        %v1038 = vpop.f32.mrf.mxu0
        %v1039 = vadd.f32 0.0, %v1038
        %1040 = vmatmul.f32.gmra.mxu0 %v958
        %v1041 = vpop.f32.mrf.mxu0
        %v1042 = vadd.f32 0.0, %v1041
        %1043 = vmatmul.f32.gmra.mxu0 %v959
        %v1044 = vpop.f32.mrf.mxu0
        %v1045 = vadd.f32 0.0, %v1044
        %1046 = vmatmul.f32.gmra.mxu0 %v960
        %v1047 = vpop.f32.mrf.mxu0
        %v1048 = vadd.f32 0.0, %v1047
        %1049 = vmatmul.f32.gmra.mxu0 %v961
        %v1050 = vpop.f32.mrf.mxu0
        %v1051 = vadd.f32 0.0, %v1050
        %1052 = vmatmul.f32.gmra.mxu0 %v962
        %v1053 = vpop.f32.mrf.mxu0
        %v1054 = vadd.f32 0.0, %v1053
        %1055 = vmatmul.f32.gmra.mxu0 %v963
        %v1056 = vpop.f32.mrf.mxu0
        %v1057 = vadd.f32 0.0, %v1056
        %1058 = vmatmul.f32.gmra.mxu0 %v964
        %v1059 = vpop.f32.mrf.mxu0
        %v1060 = vadd.f32 0.0, %v1059
        %1061 = vdwg.mxu0
        %1062 = vmatpush.msra.mxu0 %v996
        %1063 = vmatpush.msra.mxu0 %v994
        %1064 = vmatpush.msra.mxu0 %v992
        %1065 = vmatpush.msra.mxu0 %v990
        %1066 = vmatpush.msra.mxu0 %v988
        %1067 = vmatpush.msra.mxu0 %v986
        %1068 = vmatpush.msra.mxu0 %v984
        %1069 = vmatpush.msra.mxu0 %v982
        %1070 = vmatpush.msra.mxu0 %v980
        %1071 = vmatpush.msra.mxu0 %v978
        %1072 = vmatpush.msra.mxu0 %v976
        %1073 = vmatpush.msra.mxu0 %v974
        %1074 = vmatpush.msra.mxu0 %v972
        %1075 = vmatpush.msra.mxu0 %v970
        %1076 = vmatpush.msra.mxu0 %v968
        %1077 = vmatpush.msra.mxu0 %v966
        %1078 = vmatmul.f32.gmra.mxu0 %v949
        %v1079 = vpop.f32.mrf.mxu0
        %v1080 = vadd.f32 0.0, %v1079
        %1081 = vmatmul.f32.gmra.mxu0 %v950
        %v1082 = vpop.f32.mrf.mxu0
        %v1083 = vadd.f32 0.0, %v1082
        %1084 = vmatmul.f32.gmra.mxu0 %v951
        %v1085 = vpop.f32.mrf.mxu0
        %v1086 = vadd.f32 0.0, %v1085
        %1087 = vmatmul.f32.gmra.mxu0 %v952
        %v1088 = vpop.f32.mrf.mxu0
        %v1089 = vadd.f32 0.0, %v1088
        %1090 = vmatmul.f32.gmra.mxu0 %v953
        %v1091 = vpop.f32.mrf.mxu0
        %v1092 = vadd.f32 0.0, %v1091
        %1093 = vmatmul.f32.gmra.mxu0 %v954
        %v1094 = vpop.f32.mrf.mxu0
        %v1095 = vadd.f32 0.0, %v1094
        %1096 = vmatmul.f32.gmra.mxu0 %v955
        %v1097 = vpop.f32.mrf.mxu0
        %v1098 = vadd.f32 0.0, %v1097
        %1099 = vmatmul.f32.gmra.mxu0 %v956
        %v1100 = vpop.f32.mrf.mxu0
        %v1101 = vadd.f32 0.0, %v1100
        %1102 = vmatmul.f32.gmra.mxu0 %v957
        %v1103 = vpop.f32.mrf.mxu0
        %v1104 = vadd.f32 0.0, %v1103
        %1105 = vmatmul.f32.gmra.mxu0 %v958
        %v1106 = vpop.f32.mrf.mxu0
        %v1107 = vadd.f32 0.0, %v1106
        %1108 = vmatmul.f32.gmra.mxu0 %v959
        %v1109 = vpop.f32.mrf.mxu0
        %v1110 = vadd.f32 0.0, %v1109
        %1111 = vmatmul.f32.gmra.mxu0 %v960
        %v1112 = vpop.f32.mrf.mxu0
        %v1113 = vadd.f32 0.0, %v1112
        %1114 = vmatmul.f32.gmra.mxu0 %v961
        %v1115 = vpop.f32.mrf.mxu0
        %v1116 = vadd.f32 0.0, %v1115
        %1117 = vmatmul.f32.gmra.mxu0 %v962
        %v1118 = vpop.f32.mrf.mxu0
        %v1119 = vadd.f32 0.0, %v1118
        %1120 = vmatmul.f32.gmra.mxu0 %v963
        %v1121 = vpop.f32.mrf.mxu0
        %v1122 = vadd.f32 0.0, %v1121
        %1123 = vmatmul.f32.gmra.mxu0 %v964
        %v1124 = vpop.f32.mrf.mxu0
        %v1125 = vadd.f32 0.0, %v1124
        %1126 = vdwg.mxu0
        %v1127 = vsel %vm674, 1, 0
        %v1128 = vsel %vm675, 1, 0
        %v1129 = vsel %vm676, 1, 0
        %v1130 = vsel %vm677, 1, 0
        %v1131 = vsel %vm678, 1, 0
        %v1132 = vsel %vm679, 1, 0
        %v1133 = vsel %vm680, 1, 0
        %v1134 = vsel %vm681, 1, 0
        %v1135 = vsel %vm682, 1, 0
        %v1136 = vsel %vm683, 1, 0
        %v1137 = vsel %vm684, 1, 0
        %v1138 = vsel %vm685, 1, 0
        %v1139 = vsel %vm686, 1, 0
        %v1140 = vsel %vm687, 1, 0
        %v1141 = vsel %vm688, 1, 0
        %v1142 = vsel %vm689, 1, 0
        %1143 = vset.pattern.permute.xlu0 32
        %1144 = vperm.xlu0 %1143, %v1127
        %v1145 = vpop.permute.xlu0 %1144
        %1146 = vset.pattern.permute.xlu0 32
        %1147 = vperm.xlu0 %1146, %v1128
        %v1148 = vpop.permute.xlu0 %1147
        %1149 = vset.pattern.permute.xlu0 32
        %1150 = vperm.xlu0 %1149, %v1129
        %v1151 = vpop.permute.xlu0 %1150
        %1152 = vset.pattern.permute.xlu0 32
        %1153 = vperm.xlu0 %1152, %v1130
        %v1154 = vpop.permute.xlu0 %1153
        %1155 = vset.pattern.permute.xlu0 32
        %1156 = vperm.xlu0 %1155, %v1131
        %v1157 = vpop.permute.xlu0 %1156
        %1158 = vset.pattern.permute.xlu0 32
        %1159 = vperm.xlu0 %1158, %v1132
        %v1160 = vpop.permute.xlu0 %1159
        %1161 = vset.pattern.permute.xlu0 32
        %1162 = vperm.xlu0 %1161, %v1133
        %v1163 = vpop.permute.xlu0 %1162
        %1164 = vset.pattern.permute.xlu0 32
        %1165 = vperm.xlu0 %1164, %v1134
        %v1166 = vpop.permute.xlu0 %1165
        %1167 = vset.pattern.permute.xlu0 32
        %1168 = vperm.xlu0 %1167, %v1135
        %v1169 = vpop.permute.xlu0 %1168
        %1170 = vset.pattern.permute.xlu0 32
        %1171 = vperm.xlu0 %1170, %v1136
        %v1172 = vpop.permute.xlu0 %1171
        %1173 = vset.pattern.permute.xlu0 32
        %1174 = vperm.xlu0 %1173, %v1137
        %v1175 = vpop.permute.xlu0 %1174
        %1176 = vset.pattern.permute.xlu0 32
        %1177 = vperm.xlu0 %1176, %v1138
        %v1178 = vpop.permute.xlu0 %1177
        %1179 = vset.pattern.permute.xlu0 32
        %1180 = vperm.xlu0 %1179, %v1139
        %v1181 = vpop.permute.xlu0 %1180
        %1182 = vset.pattern.permute.xlu0 32
        %1183 = vperm.xlu0 %1182, %v1140
        %v1184 = vpop.permute.xlu0 %1183
        %1185 = vset.pattern.permute.xlu0 32
        %1186 = vperm.xlu0 %1185, %v1141
        %v1187 = vpop.permute.xlu0 %1186
        %1188 = vset.pattern.permute.xlu0 32
        %1189 = vperm.xlu0 %1188, %v1142
        %v1190 = vpop.permute.xlu0 %1189
        %vm1191 = vcmp.eq.s32.totalorder %v1145, 1
        %vm1192 = vcmp.eq.s32.totalorder %v1148, 1
        %vm1193 = vcmp.eq.s32.totalorder %v1151, 1
        %vm1194 = vcmp.eq.s32.totalorder %v1154, 1
        %vm1195 = vcmp.eq.s32.totalorder %v1157, 1
        %vm1196 = vcmp.eq.s32.totalorder %v1160, 1
        %vm1197 = vcmp.eq.s32.totalorder %v1163, 1
        %vm1198 = vcmp.eq.s32.totalorder %v1166, 1
        %vm1199 = vcmp.eq.s32.totalorder %v1169, 1
        %vm1200 = vcmp.eq.s32.totalorder %v1172, 1
        %vm1201 = vcmp.eq.s32.totalorder %v1175, 1
        %vm1202 = vcmp.eq.s32.totalorder %v1178, 1
        %vm1203 = vcmp.eq.s32.totalorder %v1181, 1
        %vm1204 = vcmp.eq.s32.totalorder %v1184, 1
        %vm1205 = vcmp.eq.s32.totalorder %v1187, 1
        %vm1206 = vcmp.eq.s32.totalorder %v1190, 1
        %v1207 = vsel %vm1191, %v1015, %v1080
        %v1208 = vsel %vm1192, %v1018, %v1083
        %v1209 = vsel %vm1193, %v1021, %v1086
        %v1210 = vsel %vm1194, %v1024, %v1089
        %v1211 = vsel %vm1195, %v1027, %v1092
        %v1212 = vsel %vm1196, %v1030, %v1095
        %v1213 = vsel %vm1197, %v1033, %v1098
        %v1214 = vsel %vm1198, %v1036, %v1101
        %v1215 = vsel %vm1199, %v1039, %v1104
        %v1216 = vsel %vm1200, %v1042, %v1107
        %v1217 = vsel %vm1201, %v1045, %v1110
        %v1218 = vsel %vm1202, %v1048, %v1113
        %v1219 = vsel %vm1203, %v1051, %v1116
        %v1220 = vsel %vm1204, %v1054, %v1119
        %v1221 = vsel %vm1205, %v1057, %v1122
        %v1222 = vsel %vm1206, %v1060, %v1125
        %v1223 = vld [vmem:[%s417] sm:$0xff]
        %v1224 = vld [vmem:[%s417 + $0x8] sm:$0xff]
        %v1225 = vld [vmem:[%s417 + $0x10] sm:$0xff]
        %v1226 = vld [vmem:[%s417 + $0x18] sm:$0xff]
        %v1227 = vld [vmem:[%s417 + $0x20] sm:$0xff]
        %v1228 = vld [vmem:[%s417 + $0x28] sm:$0xff]
        %v1229 = vld [vmem:[%s417 + $0x30] sm:$0xff]
        %v1230 = vld [vmem:[%s417 + $0x38] sm:$0xff]
        %v1231 = vld [vmem:[%s417 + $0x40] sm:$0xff]
        %v1232 = vld [vmem:[%s417 + $0x48] sm:$0xff]
        %v1233 = vld [vmem:[%s417 + $0x50] sm:$0xff]
        %v1234 = vld [vmem:[%s417 + $0x58] sm:$0xff]
        %v1235 = vld [vmem:[%s417 + $0x60] sm:$0xff]
        %v1236 = vld [vmem:[%s417 + $0x68] sm:$0xff]
        %v1237 = vld [vmem:[%s417 + $0x70] sm:$0xff]
        %v1238 = vld [vmem:[%s417 + $0x78] sm:$0xff]
        %v1239 = vld [vmem:[#allocation13] sm:$0xff]
        %v1240 = vld [vmem:[#allocation13 + $0x8] sm:$0xff]
        %v1241 = vld [vmem:[#allocation13 + $0x10] sm:$0xff]
        %v1242 = vld [vmem:[#allocation13 + $0x18] sm:$0xff]
        %v1243 = vld [vmem:[#allocation13 + $0x20] sm:$0xff]
        %v1244 = vld [vmem:[#allocation13 + $0x28] sm:$0xff]
        %v1245 = vld [vmem:[#allocation13 + $0x30] sm:$0xff]
        %v1246 = vld [vmem:[#allocation13 + $0x38] sm:$0xff]
        %v1247 = vld [vmem:[#allocation13 + $0x40] sm:$0xff]
        %v1248 = vld [vmem:[#allocation13 + $0x48] sm:$0xff]
        %v1249 = vld [vmem:[#allocation13 + $0x50] sm:$0xff]
        %v1250 = vld [vmem:[#allocation13 + $0x58] sm:$0xff]
        %v1251 = vld [vmem:[#allocation13 + $0x60] sm:$0xff]
        %v1252 = vld [vmem:[#allocation13 + $0x68] sm:$0xff]
        %v1253 = vld [vmem:[#allocation13 + $0x70] sm:$0xff]
        %v1254 = vld [vmem:[#allocation13 + $0x78] sm:$0xff]
        %v1255 = vld [vmem:[%s7] sm:$0x1]
        %v1257 = vperm.slane %v1255, 0
        %1259 = vmatpush.msra.mxu0 %v1254
        %1260 = vmatpush.msra.mxu0 %v1253
        %1261 = vmatpush.msra.mxu0 %v1252
        %1262 = vmatpush.msra.mxu0 %v1251
        %1263 = vmatpush.msra.mxu0 %v1250
        %1264 = vmatpush.msra.mxu0 %v1249
        %1265 = vmatpush.msra.mxu0 %v1248
        %1266 = vmatpush.msra.mxu0 %v1247
        %1267 = vmatpush.msra.mxu0 %v1246
        %1268 = vmatpush.msra.mxu0 %v1245
        %1269 = vmatpush.msra.mxu0 %v1244
        %1270 = vmatpush.msra.mxu0 %v1243
        %1271 = vmatpush.msra.mxu0 %v1242
        %1272 = vmatpush.msra.mxu0 %v1241
        %1273 = vmatpush.msra.mxu0 %v1240
        %1274 = vmatpush.msra.mxu0 %v1239
        %1275 = vmatmul.f32.gmra.mxu0 %v1223
        %v1276 = vpop.f32.mrf.mxu0
        %v1277 = vadd.f32 %v1257, %v1276
        %1278 = vmatmul.f32.gmra.mxu0 %v1224
        %v1279 = vpop.f32.mrf.mxu0
        %v1280 = vadd.f32 %v1257, %v1279
        %1281 = vmatmul.f32.gmra.mxu0 %v1225
        %v1282 = vpop.f32.mrf.mxu0
        %v1283 = vadd.f32 %v1257, %v1282
        %1284 = vmatmul.f32.gmra.mxu0 %v1226
        %v1285 = vpop.f32.mrf.mxu0
        %v1286 = vadd.f32 %v1257, %v1285
        %1287 = vmatmul.f32.gmra.mxu0 %v1227
        %v1288 = vpop.f32.mrf.mxu0
        %v1289 = vadd.f32 %v1257, %v1288
        %1290 = vmatmul.f32.gmra.mxu0 %v1228
        %v1291 = vpop.f32.mrf.mxu0
        %v1292 = vadd.f32 %v1257, %v1291
        %1293 = vmatmul.f32.gmra.mxu0 %v1229
        %v1294 = vpop.f32.mrf.mxu0
        %v1295 = vadd.f32 %v1257, %v1294
        %1296 = vmatmul.f32.gmra.mxu0 %v1230
        %v1297 = vpop.f32.mrf.mxu0
        %v1298 = vadd.f32 %v1257, %v1297
        %1299 = vmatmul.f32.gmra.mxu0 %v1231
        %v1300 = vpop.f32.mrf.mxu0
        %v1301 = vadd.f32 %v1257, %v1300
        %1302 = vmatmul.f32.gmra.mxu0 %v1232
        %v1303 = vpop.f32.mrf.mxu0
        %v1304 = vadd.f32 %v1257, %v1303
        %1305 = vmatmul.f32.gmra.mxu0 %v1233
        %v1306 = vpop.f32.mrf.mxu0
        %v1307 = vadd.f32 %v1257, %v1306
        %1308 = vmatmul.f32.gmra.mxu0 %v1234
        %v1309 = vpop.f32.mrf.mxu0
        %v1310 = vadd.f32 %v1257, %v1309
        %1311 = vmatmul.f32.gmra.mxu0 %v1235
        %v1312 = vpop.f32.mrf.mxu0
        %v1313 = vadd.f32 %v1257, %v1312
        %1314 = vmatmul.f32.gmra.mxu0 %v1236
        %v1315 = vpop.f32.mrf.mxu0
        %v1316 = vadd.f32 %v1257, %v1315
        %1317 = vmatmul.f32.gmra.mxu0 %v1237
        %v1318 = vpop.f32.mrf.mxu0
        %v1319 = vadd.f32 %v1257, %v1318
        %1320 = vmatmul.f32.gmra.mxu0 %v1238
        %v1321 = vpop.f32.mrf.mxu0
        %v1322 = vadd.f32 %v1257, %v1321
        %1323 = vdwg.mxu0
        %v1324 = vmul.f32 %v1277, 0.5
        %v1325 = vmul.f32 %v1280, 0.5
        %v1326 = vmul.f32 %v1283, 0.5
        %v1327 = vmul.f32 %v1286, 0.5
        %v1328 = vmul.f32 %v1289, 0.5
        %v1329 = vmul.f32 %v1292, 0.5
        %v1330 = vmul.f32 %v1295, 0.5
        %v1331 = vmul.f32 %v1298, 0.5
        %v1332 = vmul.f32 %v1301, 0.5
        %v1333 = vmul.f32 %v1304, 0.5
        %v1334 = vmul.f32 %v1307, 0.5
        %v1335 = vmul.f32 %v1310, 0.5
        %v1336 = vmul.f32 %v1313, 0.5
        %v1337 = vmul.f32 %v1316, 0.5
        %v1338 = vmul.f32 %v1319, 0.5
        %v1339 = vmul.f32 %v1322, 0.5
        %v1340 = vtanh.pop %v1324
        %v1341 = vtanh.pop %v1325
        %v1342 = vtanh.pop %v1326
        %v1343 = vtanh.pop %v1327
        %v1344 = vtanh.pop %v1328
        %v1345 = vtanh.pop %v1329
        %v1346 = vtanh.pop %v1330
        %v1347 = vtanh.pop %v1331
        %v1348 = vtanh.pop %v1332
        %v1349 = vtanh.pop %v1333
        %v1350 = vtanh.pop %v1334
        %v1351 = vtanh.pop %v1335
        %v1352 = vtanh.pop %v1336
        %v1353 = vtanh.pop %v1337
        %v1354 = vtanh.pop %v1338
        %v1355 = vtanh.pop %v1339
        %v1356 = vadd.f32 %v1340, 1.0
        %v1357 = vadd.f32 %v1341, 1.0
        %v1358 = vadd.f32 %v1342, 1.0
        %v1359 = vadd.f32 %v1343, 1.0
        %v1360 = vadd.f32 %v1344, 1.0
        %v1361 = vadd.f32 %v1345, 1.0
        %v1362 = vadd.f32 %v1346, 1.0
        %v1363 = vadd.f32 %v1347, 1.0
        %v1364 = vadd.f32 %v1348, 1.0
        %v1365 = vadd.f32 %v1349, 1.0
        %v1366 = vadd.f32 %v1350, 1.0
        %v1367 = vadd.f32 %v1351, 1.0
        %v1368 = vadd.f32 %v1352, 1.0
        %v1369 = vadd.f32 %v1353, 1.0
        %v1370 = vadd.f32 %v1354, 1.0
        %v1371 = vadd.f32 %v1355, 1.0
        %v1372 = vmul.f32 %v1356, 0.5
        %v1373 = vmul.f32 %v1357, 0.5
        %v1374 = vmul.f32 %v1358, 0.5
        %v1375 = vmul.f32 %v1359, 0.5
        %v1376 = vmul.f32 %v1360, 0.5
        %v1377 = vmul.f32 %v1361, 0.5
        %v1378 = vmul.f32 %v1362, 0.5
        %v1379 = vmul.f32 %v1363, 0.5
        %v1380 = vmul.f32 %v1364, 0.5
        %v1381 = vmul.f32 %v1365, 0.5
        %v1382 = vmul.f32 %v1366, 0.5
        %v1383 = vmul.f32 %v1367, 0.5
        %v1384 = vmul.f32 %v1368, 0.5
        %v1385 = vmul.f32 %v1369, 0.5
        %v1386 = vmul.f32 %v1370, 0.5
        %v1387 = vmul.f32 %v1371, 0.5
        %v1388 = vadd.f32 %v931, %v1207
        %v1389 = vadd.f32 %v932, %v1208
        %v1390 = vadd.f32 %v933, %v1209
        %v1391 = vadd.f32 %v934, %v1210
        %v1392 = vadd.f32 %v935, %v1211
        %v1393 = vadd.f32 %v936, %v1212
        %v1394 = vadd.f32 %v937, %v1213
        %v1395 = vadd.f32 %v938, %v1214
        %v1396 = vadd.f32 %v939, %v1215
        %v1397 = vadd.f32 %v940, %v1216
        %v1398 = vadd.f32 %v941, %v1217
        %v1399 = vadd.f32 %v942, %v1218
        %v1400 = vadd.f32 %v943, %v1219
        %v1401 = vadd.f32 %v944, %v1220
        %v1402 = vadd.f32 %v945, %v1221
        %v1403 = vadd.f32 %v946, %v1222
        %v1404 = vmul.f32 %v1372, %v1388
        %v1405 = vmul.f32 %v1373, %v1389
        %v1406 = vmul.f32 %v1374, %v1390
        %v1407 = vmul.f32 %v1375, %v1391
        %v1408 = vmul.f32 %v1376, %v1392
        %v1409 = vmul.f32 %v1377, %v1393
        %v1410 = vmul.f32 %v1378, %v1394
        %v1411 = vmul.f32 %v1379, %v1395
        %v1412 = vmul.f32 %v1380, %v1396
        %v1413 = vmul.f32 %v1381, %v1397
        %v1414 = vmul.f32 %v1382, %v1398
        %v1415 = vmul.f32 %v1383, %v1399
        %v1416 = vmul.f32 %v1384, %v1400
        %v1417 = vmul.f32 %v1385, %v1401
        %v1418 = vmul.f32 %v1386, %v1402
        %v1419 = vmul.f32 %v1387, %v1403
        %v1420 = vsub.f32 1.0, %v1372
        %v1421 = vsub.f32 1.0, %v1373
        %v1422 = vsub.f32 1.0, %v1374
        %v1423 = vsub.f32 1.0, %v1375
        %v1424 = vsub.f32 1.0, %v1376
        %v1425 = vsub.f32 1.0, %v1377
        %v1426 = vsub.f32 1.0, %v1378
        %v1427 = vsub.f32 1.0, %v1379
        %v1428 = vsub.f32 1.0, %v1380
        %v1429 = vsub.f32 1.0, %v1381
        %v1430 = vsub.f32 1.0, %v1382
        %v1431 = vsub.f32 1.0, %v1383
        %v1432 = vsub.f32 1.0, %v1384
        %v1433 = vsub.f32 1.0, %v1385
        %v1434 = vsub.f32 1.0, %v1386
        %v1435 = vsub.f32 1.0, %v1387
        %v1436 = vmul.f32 %v1420, %v1223
        %v1437 = vmul.f32 %v1421, %v1224
        %v1438 = vmul.f32 %v1422, %v1225
        %v1439 = vmul.f32 %v1423, %v1226
        %v1440 = vmul.f32 %v1424, %v1227
        %v1441 = vmul.f32 %v1425, %v1228
        %v1442 = vmul.f32 %v1426, %v1229
        %v1443 = vmul.f32 %v1427, %v1230
        %v1444 = vmul.f32 %v1428, %v1231
        %v1445 = vmul.f32 %v1429, %v1232
        %v1446 = vmul.f32 %v1430, %v1233
        %v1447 = vmul.f32 %v1431, %v1234
        %v1448 = vmul.f32 %v1432, %v1235
        %v1449 = vmul.f32 %v1433, %v1236
        %v1450 = vmul.f32 %v1434, %v1237
        %v1451 = vmul.f32 %v1435, %v1238
        %v1452 = vadd.f32 %v1404, %v1436
        %v1453 = vadd.f32 %v1405, %v1437
        %v1454 = vadd.f32 %v1406, %v1438
        %v1455 = vadd.f32 %v1407, %v1439
        %v1456 = vadd.f32 %v1408, %v1440
        %v1457 = vadd.f32 %v1409, %v1441
        %v1458 = vadd.f32 %v1410, %v1442
        %v1459 = vadd.f32 %v1411, %v1443
        %v1460 = vadd.f32 %v1412, %v1444
        %v1461 = vadd.f32 %v1413, %v1445
        %v1462 = vadd.f32 %v1414, %v1446
        %v1463 = vadd.f32 %v1415, %v1447
        %v1464 = vadd.f32 %v1416, %v1448
        %v1465 = vadd.f32 %v1417, %v1449
        %v1466 = vadd.f32 %v1418, %v1450
        %v1467 = vadd.f32 %v1419, %v1451
        %v1468 = vmax.f32 %v1452, 0.0
        %v1469 = vmax.f32 %v1453, 0.0
        %v1470 = vmax.f32 %v1454, 0.0
        %v1471 = vmax.f32 %v1455, 0.0
        %v1472 = vmax.f32 %v1456, 0.0
        %v1473 = vmax.f32 %v1457, 0.0
        %v1474 = vmax.f32 %v1458, 0.0
        %v1475 = vmax.f32 %v1459, 0.0
        %v1476 = vmax.f32 %v1460, 0.0
        %v1477 = vmax.f32 %v1461, 0.0
        %v1478 = vmax.f32 %v1462, 0.0
        %v1479 = vmax.f32 %v1463, 0.0
        %v1480 = vmax.f32 %v1464, 0.0
        %v1481 = vmax.f32 %v1465, 0.0
        %v1482 = vmax.f32 %v1466, 0.0
        %v1483 = vmax.f32 %v1467, 0.0
        %1484 = vst [vmem:[%s475] sm:$0xff] %v1468
        %1485 = vst [vmem:[%s475 + $0x8] sm:$0xff] %v1469
        %1486 = vst [vmem:[%s475 + $0x10] sm:$0xff] %v1470
        %1487 = vst [vmem:[%s475 + $0x18] sm:$0xff] %v1471
        %1488 = vst [vmem:[%s475 + $0x20] sm:$0xff] %v1472
        %1489 = vst [vmem:[%s475 + $0x28] sm:$0xff] %v1473
        %1490 = vst [vmem:[%s475 + $0x30] sm:$0xff] %v1474
        %1491 = vst [vmem:[%s475 + $0x38] sm:$0xff] %v1475
        %1492 = vst [vmem:[%s475 + $0x40] sm:$0xff] %v1476
        %1493 = vst [vmem:[%s475 + $0x48] sm:$0xff] %v1477
        %1494 = vst [vmem:[%s475 + $0x50] sm:$0xff] %v1478
        %1495 = vst [vmem:[%s475 + $0x58] sm:$0xff] %v1479
        %1496 = vst [vmem:[%s475 + $0x60] sm:$0xff] %v1480
        %1497 = vst [vmem:[%s475 + $0x68] sm:$0xff] %v1481
        %1498 = vst [vmem:[%s475 + $0x70] sm:$0xff] %v1482
        %1499 = vst [vmem:[%s475 + $0x78] sm:$0xff] %v1483
        %s1500 = sand.u32 %s223, 1
        %s1501 = scalar_lea.sflag [#allocation4], %s1500
        %s1502 = sand.u32 %s223, 1
        %s1503 = smul.addr %s1502, 128
        %s1504 = scalar_lea.vmem [#allocation14], %s1503
        // Predicated region
        $region81: #{tpu_custom_call.1} parent=51 // pred_check
          %p1505 = pneg %p233
        $region82: #{tpu_custom_call.1} parent=51 // pred_check_branch
          %1507 = sbr.rel (%p1505) target = $region84
        $region83: #{tpu_custom_call.1} parent=51 // pred_region
          %s1508 = smul.u32 16, %s32
          %1510 = vsyncadd %s1501, 0
          %s1511 = smul.addr %s1508, 8
          %s1512 = scalar_lea.hbm %s8, %s1511
          %s1513 = sshll.u32 %s1504, 4
          %s1514 = int_to_ptr.vmem [resolvable:$true] %s1513
          %s1515 = sshll.u32 %s1512, 4
          %s1516 = int_to_ptr.hbm [resolvable:$true] %s1515
          %1521 = dma.vmem_to_hbm [thread:$0]  %s1514, 2048, %s1516, %s1501, 128, 128, 8
        $region84: #{tpu_custom_call.1} parent=51 // pred_fallthru
          _
      $region52: #{tpu_custom_call.1} parent=5 // pred_fallthru
        _
      %p1522 = scmp.le.s32.totalorder 2, %s27
      // Predicated region
      $region85: #{tpu_custom_call.1} parent=5 // pred_check
        %p1523 = pneg %p1522
      $region86: #{tpu_custom_call.1} parent=5 // pred_check_branch
        %1525 = sbr.rel (%p1523) target = $region88
      $region87: #{tpu_custom_call.1} parent=5 // pred_region
        %s1526 = ssub.s32 %s27, 2
        // Predicated region
        $region89: #{tpu_custom_call.1} parent=87 // pred_check
          %p1527 = pneg %p239
        $region90: #{tpu_custom_call.1} parent=87 // pred_check_branch
          %1529 = sbr.rel (%p1527) target = $region92
        $region91: #{tpu_custom_call.1} parent=87 // pred_region
          %s1530 = sand.u32 %s224, 1
          %s1531 = scalar_lea.sflag [#allocation4], %s1530
          %s1532 = sand.u32 %s224, 1
          %s1533 = smul.addr %s1532, 128
          %s1534 = scalar_lea.vmem [#allocation14], %s1533
          %1536 = dma.done %s1531, 2048
        $region92: #{tpu_custom_call.1} parent=87 // pred_fallthru
          _
      $region88: #{tpu_custom_call.1} parent=5 // pred_fallthru
        _
    $region6: #{tpu_custom_call.1} parent=1 // loop_footer
      %s31 = sadd.s32 1, %s27
    $region7: #{tpu_custom_call.1} parent=1 // loop_footer_branch
      %26 = sbr.rel target = $region3
    $region8: #{tpu_custom_call.1} parent=1 // loop_exit
      _
    %1537 = vsyncpa [#allocation3], 1
    %s1538 = scalar_lea.sflag [#allocation3], 1
    %1539 = vsyncpa %s1538, 1
    %1540 = vsyncpa [#allocation6], 1
    %s1541 = scalar_lea.sflag [#allocation6], 1
    %1542 = vsyncpa %s1541, 1
    %1543 = vsyncpa [#allocation9], 1
    %s1544 = scalar_lea.sflag [#allocation9], 1
    %1545 = vsyncpa %s1544, 1
    %1546 = vsyncpa [#allocation12], 1
    %1547 = vsyncpa [#allocation4], 1
    %s1548 = scalar_lea.sflag [#allocation4], 1
    %1549 = vsyncpa %s1548, 1

</llo_original>
